<compile_context>
chip_gen: v7x
topology: tpu7x:2x2x1
jax: 0.10.0
libtpu: 0.0.40
codegen_flags: <defaults>
</compile_context>

<pallas_src>
import jax
import jax.numpy as jnp
from jax.experimental import pallas as pl
from jax.experimental.pallas import tpu as pltpu

# ---------------- problem sizes (small, consistent with the module) ----------------
B, CIN, H, W = 2, 4, 16, 16        # input image batch (NCHW at the boundary)
COUT = 8                           # backbone conv output channels
HW = H * W                         # 256 spatial positions (lane dim inside the kernel)
KIM = 9 * CIN                      # 36  im2col contraction size (3x3 taps x CIN)
F = COUT * HW                      # 2048 flattened backbone features
E = 128                            # embed_size (small stand-in for 512)
BN_EPS = 1e-5


# ------------- fused kernel: conv3x3+ReLU -> flatten -> Linear+BN(folded) -------------
def fused_kernel(xc_ref, wc_ref, bc_ref, we_ref, be_ref, o_ref):
    # xc_ref: (B, KIM, HW)   f32   transposed im2col of the padded input (lanes = spatial)
    # wc_ref: (COUT, KIM)    f32   conv weight in im2col layout
    # bc_ref: (COUT, 1)      f32   conv bias (broadcast along lanes)
    # we_ref: (COUT, HW, E)  bf16  BN-folded linear weight; [c, hw, :] == row c*HW+hw of W^T
    # be_ref: (1, E)         f32   BN-folded bias
    # o_ref:  (B, E)         f32
    conv = []
    for b in range(B):                                              # static unroll, B=2
        cb = jnp.dot(wc_ref[...], xc_ref[b],
                     preferred_element_type=jnp.float32)            # (COUT, HW) lane-dense
        conv.append(jnp.maximum(cb + bc_ref[...], 0.0))             # bias + ReLU, f32

    # Dropout is identity in eval mode.  Linear(bias=False) + folded eval-mode BatchNorm1d,
    # contracted channel-by-channel: lhs is a (B, HW) sublane concat (no lane-axis flatten),
    # rhs we_ref[c] is a tile-aligned (HW, E) view; bf16 x bf16 MXU with f32 accumulation.
    acc = jnp.zeros((B, E), jnp.float32)
    for c in range(COUT):                                           # static unroll, COUT=8
        lhs = jnp.concatenate([conv[b][c:c + 1, :] for b in range(B)],
                              axis=0).astype(jnp.bfloat16)          # (B, HW)
        acc = acc + jnp.dot(lhs, we_ref[c],
                            preferred_element_type=jnp.float32)     # (B, E)
    o_ref[...] = (acc + be_ref[...]).astype(o_ref.dtype)


_COST = pl.CostEstimate(
    flops=2 * B * COUT * KIM * HW + 2 * B * F * E,
    transcendentals=0,
    bytes_accessed=(B * KIM * HW + COUT * KIM + COUT + E + B * E) * 4   # f32 operands
                   + COUT * HW * E * 2,                                 # bf16 weight
)


def fused_forward(x_cols, w_conv_mat, b_conv_mat, w_embed, b_embed):
    return pl.pallas_call(
        fused_kernel,
        out_shape=jax.ShapeDtypeStruct((B, E), jnp.float32),
        grid_spec=pltpu.PrefetchScalarGridSpec(
            num_scalar_prefetch=0,
            grid=(1,),                  # whole problem in one step; all operands VMEM-resident
            in_specs=[
                pl.BlockSpec((B, KIM, HW), lambda i: (0, 0, 0)),
                pl.BlockSpec((COUT, KIM), lambda i: (0, 0)),
                pl.BlockSpec((COUT, 1), lambda i: (0, 0)),
                pl.BlockSpec((COUT, HW, E), lambda i: (0, 0, 0)),
                pl.BlockSpec((1, E), lambda i: (0, 0)),
            ],
            out_specs=pl.BlockSpec((B, E), lambda i: (0, 0)),
        ),
        compiler_params=pltpu.CompilerParams(
            dimension_semantics=("arbitrary",),
            # Allow the tiny im2col producer to fuse into the x_cols operand read
            # (removes the ~147 KiB HBM round trip + one XLA dispatch when legal).
            allow_input_fusion=[True, False, False, False, False],
        ),
        cost_estimate=_COST,
    )(x_cols, w_conv_mat, b_conv_mat, w_embed, b_embed)


# ---------------- full forward ----------------
def face_recognition_forward(x_nchw, kparams):
    # Transposed im2col of the 3x3/pad=1 conv:
    #   x_cols[b, (dy*3+dx)*CIN + cin, h*W + w] = x_pad[b, cin, h+dy, w+dx]
    # Built by XLA on the tiny (~10 KiB) input; eligible for input fusion into the kernel.
    x_pad = jnp.pad(x_nchw, ((0, 0), (0, 0), (1, 1), (1, 1)))
    cols = [x_pad[:, :, dy:dy + H, dx:dx + W].reshape(B, CIN, HW)
            for dy in range(3) for dx in range(3)]
    x_cols = jnp.concatenate(cols, axis=1)                           # (B, KIM, HW) f32
    return fused_forward(x_cols, kparams["w_conv_mat"], kparams["b_conv_mat"],
                         kparams["w_embed"], kparams["b_embed"])


# ---------- parameters (PyTorch layout) + one-time kernel-layout prep ----------
def init_pt_params():
    k0, k1, k2 = jax.random.split(jax.random.PRNGKey(0), 3)
    return dict(
        w_conv=jax.random.normal(k0, (COUT, CIN, 3, 3), jnp.float32) * 0.1,   # OIHW
        b_conv=jax.random.normal(k1, (COUT,), jnp.float32) * 0.1,
        w_lin=jax.random.normal(k2, (E, F), jnp.float32) / jnp.sqrt(F),       # (out, in), no bias
        bn_gamma=jnp.ones((E,), jnp.float32),                                 # PyTorch BN defaults
        bn_beta=jnp.zeros((E,), jnp.float32),
        bn_mean=jnp.zeros((E,), jnp.float32),
        bn_var=jnp.ones((E,), jnp.float32),
    )


def prepare_kernel_params(pt):
    # Conv weight OIHW -> (COUT, KIM) im2col layout, column = (dy*3+dx)*CIN + cin.
    w_conv_mat = jnp.transpose(pt["w_conv"], (0, 2, 3, 1)).reshape(COUT, KIM)
    b_conv_mat = pt["b_conv"].reshape(COUT, 1)
    # Fold eval-mode BatchNorm1d into the bias-free linear layer (exact, done in f32),
    # then reshape rows (f = c*HW + hw, PyTorch NCHW-flatten order) to (COUT, HW, E) and
    # store in bf16 -- this is the dominant HBM read of the kernel.
    scale = pt["bn_gamma"] * jax.lax.rsqrt(pt["bn_var"] + BN_EPS)             # (E,)
    w_embed = (pt["w_lin"].T * scale[None, :]).reshape(COUT, HW, E).astype(jnp.bfloat16)
    b_embed = (pt["bn_beta"] - pt["bn_mean"] * scale).reshape(1, E)           # f32
    return dict(w_conv_mat=w_conv_mat, b_conv_mat=b_conv_mat,
                w_embed=w_embed, b_embed=b_embed)


# ---------------- pure-JAX reference (eval-mode PyTorch semantics, all f32) ----------------
def reference_forward(x_nchw, pt):
    conv = jax.lax.conv_general_dilated(
        x_nchw, pt["w_conv"], window_strides=(1, 1), padding=((1, 1), (1, 1)),
        dimension_numbers=("NCHW", "OIHW", "NCHW"))
    conv = jnp.maximum(conv + pt["b_conv"][None, :, None, None], 0.0)
    feat = conv.reshape(B, F)                       # nn.Flatten() on NCHW
    y = feat @ pt["w_lin"].T                        # Dropout=identity (eval); Linear, no bias
    scale = pt["bn_gamma"] * jax.lax.rsqrt(pt["bn_var"] + BN_EPS)
    return (y - pt["bn_mean"]) * scale + pt["bn_beta"]


if __name__ == "__main__":
    pt = init_pt_params()
    kparams = prepare_kernel_params(pt)
    x = jax.random.normal(jax.random.PRNGKey(0), (B, CIN, H, W), jnp.float32)

    out = jax.jit(face_recognition_forward)(x, kparams)
    out = jax.block_until_ready(out)

    assert out.shape == (B, E), out.shape
    assert bool(jnp.all(jnp.isfinite(out)))

    ref = reference_forward(x, pt)
    max_err = float(jnp.max(jnp.abs(out - ref)))
    # bf16 weight/activation storage with f32 accumulation: expected worst case ~1e-2
    # (the all-f32 path warrants ~1e-5; this bound is a conscious bf16 decision).
    assert max_err < 2e-2, f"max abs error vs reference: {max_err}"

    print("KERNEL_OK")
</pallas_src>

<mosaic_0001>
module attributes {stable_mosaic.version = 11 : i64} {
  func.func @fused_kernel(%arg0: i32, %arg1: memref<2x36x256xf32, #tpu.memory_space<vmem>>, %arg2: memref<8x36xf32, #tpu.memory_space<vmem>>, %arg3: memref<8x1xf32, #tpu.memory_space<vmem>>, %arg4: memref<8x256x128xbf16, #tpu.memory_space<vmem>>, %arg5: memref<1x128xf32, #tpu.memory_space<vmem>>, %arg6: memref<2x128xf32, #tpu.memory_space<vmem>>) attributes {dimension_semantics = [#tpu.dimension_semantics<arbitrary>], iteration_bounds = array<i64: 1>, scalar_prefetch = 0 : i64, scratch_operands = 0 : i64, tpu.core_type = #tpu.core_type<tc>, window_params = [{pipeline_mode = #tpu.pipeline_mode<synchronous>, transform_indices = @transform_0, window_bounds = array<i64: 2, 36, 256>}, {pipeline_mode = #tpu.pipeline_mode<synchronous>, transform_indices = @transform_1, window_bounds = array<i64: 8, 36>}, {pipeline_mode = #tpu.pipeline_mode<synchronous>, transform_indices = @transform_2, window_bounds = array<i64: 8, 1>}, {pipeline_mode = #tpu.pipeline_mode<synchronous>, transform_indices = @transform_3, window_bounds = array<i64: 8, 256, 128>}, {pipeline_mode = #tpu.pipeline_mode<synchronous>, transform_indices = @transform_4, window_bounds = array<i64: 1, 128>}, {pipeline_mode = #tpu.pipeline_mode<synchronous>, transform_indices = @transform_5, window_bounds = array<i64: 2, 128>}]} {
    %c0 = arith.constant 0 : index
    %c0_0 = arith.constant 0 : index
    %0 = vector.load %arg2[%c0, %c0_0] : memref<8x36xf32, #tpu.memory_space<vmem>>, vector<8x36xf32>
    %c0_1 = arith.constant 0 : index
    %c0_2 = arith.constant 0 : index
    %c0_3 = arith.constant 0 : index
    %1 = vector.load %arg1[%c0_1, %c0_2, %c0_3] : memref<2x36x256xf32, #tpu.memory_space<vmem>>, vector<1x36x256xf32>
    %2 = vector.shape_cast %1 : vector<1x36x256xf32> to vector<36x256xf32>
    %cst = arith.constant dense<0.000000e+00> : vector<8x256xf32>
    %3 = tpu.matmul %0, %2, %cst {dimension_numbers = #tpu.dot_dimension_numbers<[1], [0], [0], [1], [0, 0, 1, 1], [], []>} : vector<8x36xf32>, vector<36x256xf32>, vector<8x256xf32> -> vector<8x256xf32>
    %c0_4 = arith.constant 0 : index
    %c0_5 = arith.constant 0 : index
    %4 = vector.load %arg3[%c0_4, %c0_5] : memref<8x1xf32, #tpu.memory_space<vmem>>, vector<8x1xf32>
    %5 = vector.broadcast %4 : vector<8x1xf32> to vector<8x256xf32>
    %6 = arith.addf %3, %5 : vector<8x256xf32>
    %cst_6 = arith.constant 0.000000e+00 : f32
    %7 = vector.broadcast %cst_6 : f32 to vector<8x256xf32>
    %8 = arith.maximumf %6, %7 : vector<8x256xf32>
    %c0_7 = arith.constant 0 : index
    %c0_8 = arith.constant 0 : index
    %9 = vector.load %arg2[%c0_7, %c0_8] : memref<8x36xf32, #tpu.memory_space<vmem>>, vector<8x36xf32>
    %c1 = arith.constant 1 : index
    %c0_9 = arith.constant 0 : index
    %c0_10 = arith.constant 0 : index
    %10 = vector.load %arg1[%c1, %c0_9, %c0_10] : memref<2x36x256xf32, #tpu.memory_space<vmem>>, vector<1x36x256xf32>
    %11 = vector.shape_cast %10 : vector<1x36x256xf32> to vector<36x256xf32>
    %cst_11 = arith.constant dense<0.000000e+00> : vector<8x256xf32>
    %12 = tpu.matmul %9, %11, %cst_11 {dimension_numbers = #tpu.dot_dimension_numbers<[1], [0], [0], [1], [0, 0, 1, 1], [], []>} : vector<8x36xf32>, vector<36x256xf32>, vector<8x256xf32> -> vector<8x256xf32>
    %c0_12 = arith.constant 0 : index
    %c0_13 = arith.constant 0 : index
    %13 = vector.load %arg3[%c0_12, %c0_13] : memref<8x1xf32, #tpu.memory_space<vmem>>, vector<8x1xf32>
    %14 = vector.broadcast %13 : vector<8x1xf32> to vector<8x256xf32>
    %15 = arith.addf %12, %14 : vector<8x256xf32>
    %cst_14 = arith.constant 0.000000e+00 : f32
    %16 = vector.broadcast %cst_14 : f32 to vector<8x256xf32>
    %17 = arith.maximumf %15, %16 : vector<8x256xf32>
    %cst_15 = arith.constant 0.000000e+00 : f32
    %18 = vector.broadcast %cst_15 : f32 to vector<2x128xf32>
    %19 = vector.extract_strided_slice %8 {offsets = [0, 0], sizes = [1, 256], strides = [1, 1]} : vector<8x256xf32> to vector<1x256xf32>
    %20 = vector.extract_strided_slice %17 {offsets = [0, 0], sizes = [1, 256], strides = [1, 1]} : vector<8x256xf32> to vector<1x256xf32>
    %21 = tpu.concatenate %19, %20 in 0 : vector<1x256xf32>, vector<1x256xf32> -> vector<2x256xf32>
    %22 = arith.truncf %21 : vector<2x256xf32> to vector<2x256xbf16>
    %c0_16 = arith.constant 0 : index
    %c0_17 = arith.constant 0 : index
    %c0_18 = arith.constant 0 : index
    %23 = vector.load %arg4[%c0_16, %c0_17, %c0_18] : memref<8x256x128xbf16, #tpu.memory_space<vmem>>, vector<1x256x128xbf16>
    %24 = vector.shape_cast %23 : vector<1x256x128xbf16> to vector<256x128xbf16>
    %cst_19 = arith.constant dense<0.000000e+00> : vector<2x128xf32>
    %25 = tpu.matmul %22, %24, %cst_19 {dimension_numbers = #tpu.dot_dimension_numbers<[1], [0], [0], [1], [0, 0, 1, 1], [], []>} : vector<2x256xbf16>, vector<256x128xbf16>, vector<2x128xf32> -> vector<2x128xf32>
    %26 = arith.addf %18, %25 : vector<2x128xf32>
    %27 = vector.extract_strided_slice %8 {offsets = [1, 0], sizes = [1, 256], strides = [1, 1]} : vector<8x256xf32> to vector<1x256xf32>
    %28 = vector.extract_strided_slice %17 {offsets = [1, 0], sizes = [1, 256], strides = [1, 1]} : vector<8x256xf32> to vector<1x256xf32>
    %29 = tpu.concatenate %27, %28 in 0 : vector<1x256xf32>, vector<1x256xf32> -> vector<2x256xf32>
    %30 = arith.truncf %29 : vector<2x256xf32> to vector<2x256xbf16>
    %c1_20 = arith.constant 1 : index
    %c0_21 = arith.constant 0 : index
    %c0_22 = arith.constant 0 : index
    %31 = vector.load %arg4[%c1_20, %c0_21, %c0_22] : memref<8x256x128xbf16, #tpu.memory_space<vmem>>, vector<1x256x128xbf16>
    %32 = vector.shape_cast %31 : vector<1x256x128xbf16> to vector<256x128xbf16>
    %cst_23 = arith.constant dense<0.000000e+00> : vector<2x128xf32>
    %33 = tpu.matmul %30, %32, %cst_23 {dimension_numbers = #tpu.dot_dimension_numbers<[1], [0], [0], [1], [0, 0, 1, 1], [], []>} : vector<2x256xbf16>, vector<256x128xbf16>, vector<2x128xf32> -> vector<2x128xf32>
    %34 = arith.addf %26, %33 : vector<2x128xf32>
    %35 = vector.extract_strided_slice %8 {offsets = [2, 0], sizes = [1, 256], strides = [1, 1]} : vector<8x256xf32> to vector<1x256xf32>
    %36 = vector.extract_strided_slice %17 {offsets = [2, 0], sizes = [1, 256], strides = [1, 1]} : vector<8x256xf32> to vector<1x256xf32>
    %37 = tpu.concatenate %35, %36 in 0 : vector<1x256xf32>, vector<1x256xf32> -> vector<2x256xf32>
    %38 = arith.truncf %37 : vector<2x256xf32> to vector<2x256xbf16>
    %c2 = arith.constant 2 : index
    %c0_24 = arith.constant 0 : index
    %c0_25 = arith.constant 0 : index
    %39 = vector.load %arg4[%c2, %c0_24, %c0_25] : memref<8x256x128xbf16, #tpu.memory_space<vmem>>, vector<1x256x128xbf16>
    %40 = vector.shape_cast %39 : vector<1x256x128xbf16> to vector<256x128xbf16>
    %cst_26 = arith.constant dense<0.000000e+00> : vector<2x128xf32>
    %41 = tpu.matmul %38, %40, %cst_26 {dimension_numbers = #tpu.dot_dimension_numbers<[1], [0], [0], [1], [0, 0, 1, 1], [], []>} : vector<2x256xbf16>, vector<256x128xbf16>, vector<2x128xf32> -> vector<2x128xf32>
    %42 = arith.addf %34, %41 : vector<2x128xf32>
    %43 = vector.extract_strided_slice %8 {offsets = [3, 0], sizes = [1, 256], strides = [1, 1]} : vector<8x256xf32> to vector<1x256xf32>
    %44 = vector.extract_strided_slice %17 {offsets = [3, 0], sizes = [1, 256], strides = [1, 1]} : vector<8x256xf32> to vector<1x256xf32>
    %45 = tpu.concatenate %43, %44 in 0 : vector<1x256xf32>, vector<1x256xf32> -> vector<2x256xf32>
    %46 = arith.truncf %45 : vector<2x256xf32> to vector<2x256xbf16>
    %c3 = arith.constant 3 : index
    %c0_27 = arith.constant 0 : index
    %c0_28 = arith.constant 0 : index
    %47 = vector.load %arg4[%c3, %c0_27, %c0_28] : memref<8x256x128xbf16, #tpu.memory_space<vmem>>, vector<1x256x128xbf16>
    %48 = vector.shape_cast %47 : vector<1x256x128xbf16> to vector<256x128xbf16>
    %cst_29 = arith.constant dense<0.000000e+00> : vector<2x128xf32>
    %49 = tpu.matmul %46, %48, %cst_29 {dimension_numbers = #tpu.dot_dimension_numbers<[1], [0], [0], [1], [0, 0, 1, 1], [], []>} : vector<2x256xbf16>, vector<256x128xbf16>, vector<2x128xf32> -> vector<2x128xf32>
    %50 = arith.addf %42, %49 : vector<2x128xf32>
    %51 = vector.extract_strided_slice %8 {offsets = [4, 0], sizes = [1, 256], strides = [1, 1]} : vector<8x256xf32> to vector<1x256xf32>
    %52 = vector.extract_strided_slice %17 {offsets = [4, 0], sizes = [1, 256], strides = [1, 1]} : vector<8x256xf32> to vector<1x256xf32>
    %53 = tpu.concatenate %51, %52 in 0 : vector<1x256xf32>, vector<1x256xf32> -> vector<2x256xf32>
    %54 = arith.truncf %53 : vector<2x256xf32> to vector<2x256xbf16>
    %c4 = arith.constant 4 : index
    %c0_30 = arith.constant 0 : index
    %c0_31 = arith.constant 0 : index
    %55 = vector.load %arg4[%c4, %c0_30, %c0_31] : memref<8x256x128xbf16, #tpu.memory_space<vmem>>, vector<1x256x128xbf16>
    %56 = vector.shape_cast %55 : vector<1x256x128xbf16> to vector<256x128xbf16>
    %cst_32 = arith.constant dense<0.000000e+00> : vector<2x128xf32>
    %57 = tpu.matmul %54, %56, %cst_32 {dimension_numbers = #tpu.dot_dimension_numbers<[1], [0], [0], [1], [0, 0, 1, 1], [], []>} : vector<2x256xbf16>, vector<256x128xbf16>, vector<2x128xf32> -> vector<2x128xf32>
    %58 = arith.addf %50, %57 : vector<2x128xf32>
    %59 = vector.extract_strided_slice %8 {offsets = [5, 0], sizes = [1, 256], strides = [1, 1]} : vector<8x256xf32> to vector<1x256xf32>
    %60 = vector.extract_strided_slice %17 {offsets = [5, 0], sizes = [1, 256], strides = [1, 1]} : vector<8x256xf32> to vector<1x256xf32>
    %61 = tpu.concatenate %59, %60 in 0 : vector<1x256xf32>, vector<1x256xf32> -> vector<2x256xf32>
    %62 = arith.truncf %61 : vector<2x256xf32> to vector<2x256xbf16>
    %c5 = arith.constant 5 : index
    %c0_33 = arith.constant 0 : index
    %c0_34 = arith.constant 0 : index
    %63 = vector.load %arg4[%c5, %c0_33, %c0_34] : memref<8x256x128xbf16, #tpu.memory_space<vmem>>, vector<1x256x128xbf16>
    %64 = vector.shape_cast %63 : vector<1x256x128xbf16> to vector<256x128xbf16>
    %cst_35 = arith.constant dense<0.000000e+00> : vector<2x128xf32>
    %65 = tpu.matmul %62, %64, %cst_35 {dimension_numbers = #tpu.dot_dimension_numbers<[1], [0], [0], [1], [0, 0, 1, 1], [], []>} : vector<2x256xbf16>, vector<256x128xbf16>, vector<2x128xf32> -> vector<2x128xf32>
    %66 = arith.addf %58, %65 : vector<2x128xf32>
    %67 = vector.extract_strided_slice %8 {offsets = [6, 0], sizes = [1, 256], strides = [1, 1]} : vector<8x256xf32> to vector<1x256xf32>
    %68 = vector.extract_strided_slice %17 {offsets = [6, 0], sizes = [1, 256], strides = [1, 1]} : vector<8x256xf32> to vector<1x256xf32>
    %69 = tpu.concatenate %67, %68 in 0 : vector<1x256xf32>, vector<1x256xf32> -> vector<2x256xf32>
    %70 = arith.truncf %69 : vector<2x256xf32> to vector<2x256xbf16>
    %c6 = arith.constant 6 : index
    %c0_36 = arith.constant 0 : index
    %c0_37 = arith.constant 0 : index
    %71 = vector.load %arg4[%c6, %c0_36, %c0_37] : memref<8x256x128xbf16, #tpu.memory_space<vmem>>, vector<1x256x128xbf16>
    %72 = vector.shape_cast %71 : vector<1x256x128xbf16> to vector<256x128xbf16>
    %cst_38 = arith.constant dense<0.000000e+00> : vector<2x128xf32>
    %73 = tpu.matmul %70, %72, %cst_38 {dimension_numbers = #tpu.dot_dimension_numbers<[1], [0], [0], [1], [0, 0, 1, 1], [], []>} : vector<2x256xbf16>, vector<256x128xbf16>, vector<2x128xf32> -> vector<2x128xf32>
    %74 = arith.addf %66, %73 : vector<2x128xf32>
    %75 = vector.extract_strided_slice %8 {offsets = [7, 0], sizes = [1, 256], strides = [1, 1]} : vector<8x256xf32> to vector<1x256xf32>
    %76 = vector.extract_strided_slice %17 {offsets = [7, 0], sizes = [1, 256], strides = [1, 1]} : vector<8x256xf32> to vector<1x256xf32>
    %77 = tpu.concatenate %75, %76 in 0 : vector<1x256xf32>, vector<1x256xf32> -> vector<2x256xf32>
    %78 = arith.truncf %77 : vector<2x256xf32> to vector<2x256xbf16>
    %c7 = arith.constant 7 : index
    %c0_39 = arith.constant 0 : index
    %c0_40 = arith.constant 0 : index
    %79 = vector.load %arg4[%c7, %c0_39, %c0_40] : memref<8x256x128xbf16, #tpu.memory_space<vmem>>, vector<1x256x128xbf16>
    %80 = vector.shape_cast %79 : vector<1x256x128xbf16> to vector<256x128xbf16>
    %cst_41 = arith.constant dense<0.000000e+00> : vector<2x128xf32>
    %81 = tpu.matmul %78, %80, %cst_41 {dimension_numbers = #tpu.dot_dimension_numbers<[1], [0], [0], [1], [0, 0, 1, 1], [], []>} : vector<2x256xbf16>, vector<256x128xbf16>, vector<2x128xf32> -> vector<2x128xf32>
    %82 = arith.addf %74, %81 : vector<2x128xf32>
    %c0_42 = arith.constant 0 : index
    %c0_43 = arith.constant 0 : index
    %83 = vector.load %arg5[%c0_42, %c0_43] : memref<1x128xf32, #tpu.memory_space<vmem>>, vector<1x128xf32>
    %84 = vector.broadcast %83 : vector<1x128xf32> to vector<2x128xf32>
    %85 = arith.addf %82, %84 : vector<2x128xf32>
    %c0_44 = arith.constant 0 : index
    %c0_45 = arith.constant 0 : index
    %86 = vector.load %arg6[%c0_44, %c0_45] : memref<2x128xf32, #tpu.memory_space<vmem>>, vector<2x128xf32>
    tpu.vector_store %arg6[%c0_44, %c0_45], %85 {strides = array<i32>} : memref<2x128xf32, #tpu.memory_space<vmem>>, vector<2x128xf32>,
    return
  }
  func.func @transform_0(%arg0: i32) -> (i32, i32, i32) {
    %c0_i32 = arith.constant 0 : i32
    %c0_i32_0 = arith.constant 0 : i32
    %c0_i32_1 = arith.constant 0 : i32
    %c0_i32_2 = arith.constant 0 : i32
    return %c0_i32, %c0_i32_0, %c0_i32_1 : i32, i32, i32
  }
  func.func @transform_1(%arg0: i32) -> (i32, i32) {
    %c0_i32 = arith.constant 0 : i32
    %c0_i32_0 = arith.constant 0 : i32
    %c0_i32_1 = arith.constant 0 : i32
    return %c0_i32, %c0_i32_0 : i32, i32
  }
  func.func @transform_2(%arg0: i32) -> (i32, i32) {
    %c0_i32 = arith.constant 0 : i32
    %c0_i32_0 = arith.constant 0 : i32
    %c0_i32_1 = arith.constant 0 : i32
    return %c0_i32, %c0_i32_0 : i32, i32
  }
  func.func @transform_3(%arg0: i32) -> (i32, i32, i32) {
    %c0_i32 = arith.constant 0 : i32
    %c0_i32_0 = arith.constant 0 : i32
    %c0_i32_1 = arith.constant 0 : i32
    %c0_i32_2 = arith.constant 0 : i32
    return %c0_i32, %c0_i32_0, %c0_i32_1 : i32, i32, i32
  }
  func.func @transform_4(%arg0: i32) -> (i32, i32) {
    %c0_i32 = arith.constant 0 : i32
    %c0_i32_0 = arith.constant 0 : i32
    %c0_i32_1 = arith.constant 0 : i32
    return %c0_i32, %c0_i32_0 : i32, i32
  }
  func.func @transform_5(%arg0: i32) -> (i32, i32) {
    %c0_i32 = arith.constant 0 : i32
    %c0_i32_0 = arith.constant 0 : i32
    %c0_i32_1 = arith.constant 0 : i32
    return %c0_i32, %c0_i32_0 : i32, i32
  }
}

</mosaic_0001>

<llo_original>
// kernel: face_recognition_forward.1
$region0: #{face_recognition_forward.1}
  #allocation0 [shape = 'u32[]', space=smem, size = 0x4, offset = 0x4, fixed_abs, tag = 'smem constant byte address 0x4 - core index']
  #allocation1 [shape = 'u32[144,128]{1,0:T(1,128)}', space=vmem, size = 0x12000, scoped, tag = 'internal scratch']
  %s0 = inlined_call_operand.vmem [shape: f32[2,36,256], index: 0, kind: input, shape index: {}]
  %s1 = inlined_call_operand.vmem [shape: f32[8,36], index: 1, kind: input, shape index: {}]
  %s2 = inlined_call_operand.vmem [shape: f32[8,1], index: 2, kind: input, shape index: {}]
  %s3 = inlined_call_operand.vmem [shape: bf16[8,256,128], index: 3, kind: input, shape index: {}]
  %s4 = inlined_call_operand.vmem [shape: f32[1,128], index: 4, kind: input, shape index: {}]
  %s5 = inlined_call_operand.hbm [shape: f32[2,128], index: 5, kind: output, shape index: {}]
  %s6 = sld [smem:[#allocation0]]
  $region30: #{face_recognition_forward.1} parent=0
    _
  %s8 = ssub.s32 1, %s6
  %s9 = scalar_select 0, %s8, %s6
  $region1: #{face_recognition_forward.1} parent=0
    #allocation2 [shape = 'u8[1024]{0}', space=vmem, size = 0x400, scoped, tag = 'output window, operand 0, single buffered']
    #allocation3 [shape = 's32[1]{0}', space=sflag, size = 0x4, scoped, tag = 'scoped memory for face_recognition_forward.1']
    %10 = vsyncpa [#allocation3], 0
    // Predicated region
    $region2: #{face_recognition_forward.1} parent=1 // pred_check
      _
    $region3: #{face_recognition_forward.1} parent=1 // pred_check_branch
      %12 = sbr.rel (0) target = $region5
    $region4: #{face_recognition_forward.1} parent=1 // pred_region
      _
    $region5: #{face_recognition_forward.1} parent=1 // pred_fallthru
      _
    // Predicated region
    $region6: #{face_recognition_forward.1} parent=1 // pred_check
      _
    $region7: #{face_recognition_forward.1} parent=1 // pred_check_branch
      %14 = sbr.rel (0) target = $region9
    $region8: #{face_recognition_forward.1} parent=1 // pred_region
      _
    $region9: #{face_recognition_forward.1} parent=1 // pred_fallthru
      _
    // Predicated region
    $region10: #{face_recognition_forward.1} parent=1 // pred_check
      _
    $region11: #{face_recognition_forward.1} parent=1 // pred_check_branch
      %16 = sbr.rel (0) target = $region13
    $region12: #{face_recognition_forward.1} parent=1 // pred_region
      _
    $region13: #{face_recognition_forward.1} parent=1 // pred_fallthru
      _
    // Predicated region
    $region14: #{face_recognition_forward.1} parent=1 // pred_check
      _
    $region15: #{face_recognition_forward.1} parent=1 // pred_check_branch
      %18 = sbr.rel (0) target = $region17
    $region16: #{face_recognition_forward.1} parent=1 // pred_region
      _
    $region17: #{face_recognition_forward.1} parent=1 // pred_fallthru
      _
    // Predicated region
    $region18: #{face_recognition_forward.1} parent=1 // pred_check
      _
    $region19: #{face_recognition_forward.1} parent=1 // pred_check_branch
      %20 = sbr.rel (0) target = $region21
    $region20: #{face_recognition_forward.1} parent=1 // pred_region
      _
    $region21: #{face_recognition_forward.1} parent=1 // pred_fallthru
      _
    %v22 = vld [vmem:[%s1] sm:$0xff]
    %v23 = vld [vmem:[%s0] sm:$0xff]
    %v24 = vld [vmem:[%s0 + $0x8] sm:$0xff]
    %v25 = vld [vmem:[%s0 + $0x10] sm:$0xff]
    %v26 = vld [vmem:[%s0 + $0x18] sm:$0xff]
    %v27 = vld [vmem:[%s0 + $0x20] sm:$0xff]
    %v28 = vld [vmem:[%s0 + $0x28] sm:$0xff]
    %v29 = vld [vmem:[%s0 + $0x30] sm:$0xff]
    %v30 = vld [vmem:[%s0 + $0x38] sm:$0xff]
    %v31 = vld [vmem:[%s0 + $0x40] sm:$0xf]
    %v32 = vld [vmem:[%s0 + $0x48] sm:$0xf]
    %v33 = vld [vmem:[%s2] sm:$0xff]
    %35 = vset.pattern.permute.xlu0 0
    %36 = vperm.xlu0 %35, %v33
    %v37 = vpop.permute.xlu0 %36
    %vm39 = vcmask 293888
    %v41 = vsel %vm39, %v22, 0
    %vm43 = vcmask 1043456
    %v45 = vsel %vm43, %v31, 0
    %v48 = vsel %vm43, %v32, 0
    %50 = vmatprep.subr.mxu0 %v24
    %51 = vmatpush1.msra.mxu0 %v23
    %52 = vmatprep.subr.mxu0 %v26
    %53 = vmatpush1.msra.mxu0 %v25
    %54 = vmatprep.subr.mxu0 %v28
    %55 = vmatpush1.msra.mxu0 %v27
    %56 = vmatprep.subr.mxu0 %v30
    %57 = vmatpush1.msra.mxu0 %v29
    %58 = vmatprep.subr.mxu0 %v48
    %59 = vmatpush1.msra.mxu0 %v45
    %60 = vmatprep.subr.mxu0 0.0
    %61 = vmatpush1.msra.mxu0 0.0
    %62 = vmatprep.subr.mxu0 0.0
    %63 = vmatpush1.msra.mxu0 0.0
    %64 = vmatprep.subr.mxu0 0.0
    %65 = vmatpush1.msra.mxu0 0.0
    %66 = vmatprep.subr.mxu0 0.0
    %67 = vmatpush1.msra.mxu0 0.0
    %68 = vmatprep.subr.mxu0 0.0
    %69 = vmatpush1.msra.mxu0 0.0
    %70 = vmatprep.subr.mxu0 0.0
    %71 = vmatpush1.msra.mxu0 0.0
    %72 = vmatprep.subr.mxu0 0.0
    %73 = vmatpush1.msra.mxu0 0.0
    %74 = vmatprep.subr.mxu0 0.0
    %75 = vmatpush1.msra.mxu0 0.0
    %76 = vmatprep.subr.mxu0 0.0
    %77 = vmatpush1.msra.mxu0 0.0
    %78 = vmatprep.subr.mxu0 0.0
    %79 = vmatpush1.msra.mxu0 0.0
    %80 = vmatprep.subr.mxu0 0.0
    %81 = vmatpush1.msra.mxu0 0.0
    %82 = vmatprep.subr.mxu0 0.0
    %83 = vmatpush1.msra.mxu0 0.0
    %84 = vmatprep.subr.mxu0 0.0
    %85 = vmatpush1.msra.mxu0 0.0
    %86 = vmatprep.subr.mxu0 0.0
    %87 = vmatpush1.msra.mxu0 0.0
    %88 = vmatprep.subr.mxu0 0.0
    %89 = vmatpush1.msra.mxu0 0.0
    %90 = vmatprep.subr.mxu0 0.0
    %91 = vmatpush1.msra.mxu0 0.0
    %92 = vmatprep.subr.mxu0 0.0
    %93 = vmatpush1.msra.mxu0 0.0
    %94 = vmatprep.subr.mxu0 0.0
    %95 = vmatpush1.msra.mxu0 0.0
    %96 = vmatprep.subr.mxu0 0.0
    %97 = vmatpush1.msra.mxu0 0.0
    %98 = vmatprep.subr.mxu0 0.0
    %99 = vmatpush1.msra.mxu0 0.0
    %100 = vmatprep.subr.mxu0 0.0
    %101 = vmatpush1.msra.mxu0 0.0
    %102 = vmatprep.subr.mxu0 0.0
    %103 = vmatpush1.msra.mxu0 0.0
    %104 = vmatprep.subr.mxu0 0.0
    %105 = vmatpush1.msra.mxu0 0.0
    %106 = vmatprep.subr.mxu0 0.0
    %107 = vmatpush1.msra.mxu0 0.0
    %108 = vmatprep.subr.mxu0 0.0
    %109 = vmatpush1.msra.mxu0 0.0
    %110 = vmatprep.subr.mxu0 0.0
    %111 = vmatpush1.msra.mxu0 0.0
    %112 = vmatprep.subr.mxu0 0.0
    %113 = vmatpush1.msra.mxu0 0.0
    %114 = vmatprep.mubr.f32.mxu0 0.0
    %115 = vmatmul.mubr.f32.gmra.mrb[0].mxu0 %v41
    %v116 = vpop.f32.mrb[0].mxu0
    %v117 = vadd.f32 %v37, %v116
    %v118 = vpop.f32.mrb[0].mxu0
    %v119 = vadd.f32 %v37, %v118
    %120 = vdwg.mxu0
    %v121 = vmax.f32 %v117, 0.0
    %v122 = vmax.f32 %v119, 0.0
    %s123 = scalar_lea.vmem %s0, 80
    %v124 = vld [vmem:[%s123] sm:$0xff]
    %v125 = vld [vmem:[%s123 + $0x8] sm:$0xff]
    %v126 = vld [vmem:[%s123 + $0x10] sm:$0xff]
    %v127 = vld [vmem:[%s123 + $0x18] sm:$0xff]
    %v128 = vld [vmem:[%s123 + $0x20] sm:$0xff]
    %v129 = vld [vmem:[%s123 + $0x28] sm:$0xff]
    %v130 = vld [vmem:[%s123 + $0x30] sm:$0xff]
    %v131 = vld [vmem:[%s123 + $0x38] sm:$0xff]
    %v132 = vld [vmem:[%s123 + $0x40] sm:$0xf]
    %v133 = vld [vmem:[%s123 + $0x48] sm:$0xf]
    %v135 = vsel %vm43, %v132, 0
    %v138 = vsel %vm43, %v133, 0
    %140 = vmatprep.subr.mxu0 %v125
    %141 = vmatpush1.msra.mxu0 %v124
    %142 = vmatprep.subr.mxu0 %v127
    %143 = vmatpush1.msra.mxu0 %v126
    %144 = vmatprep.subr.mxu0 %v129
    %145 = vmatpush1.msra.mxu0 %v128
    %146 = vmatprep.subr.mxu0 %v131
    %147 = vmatpush1.msra.mxu0 %v130
    %148 = vmatprep.subr.mxu0 %v138
    %149 = vmatpush1.msra.mxu0 %v135
    %150 = vmatprep.subr.mxu0 0.0
    %151 = vmatpush1.msra.mxu0 0.0
    %152 = vmatprep.subr.mxu0 0.0
    %153 = vmatpush1.msra.mxu0 0.0
    %154 = vmatprep.subr.mxu0 0.0
    %155 = vmatpush1.msra.mxu0 0.0
    %156 = vmatprep.subr.mxu0 0.0
    %157 = vmatpush1.msra.mxu0 0.0
    %158 = vmatprep.subr.mxu0 0.0
    %159 = vmatpush1.msra.mxu0 0.0
    %160 = vmatprep.subr.mxu0 0.0
    %161 = vmatpush1.msra.mxu0 0.0
    %162 = vmatprep.subr.mxu0 0.0
    %163 = vmatpush1.msra.mxu0 0.0
    %164 = vmatprep.subr.mxu0 0.0
    %165 = vmatpush1.msra.mxu0 0.0
    %166 = vmatprep.subr.mxu0 0.0
    %167 = vmatpush1.msra.mxu0 0.0
    %168 = vmatprep.subr.mxu0 0.0
    %169 = vmatpush1.msra.mxu0 0.0
    %170 = vmatprep.subr.mxu0 0.0
    %171 = vmatpush1.msra.mxu0 0.0
    %172 = vmatprep.subr.mxu0 0.0
    %173 = vmatpush1.msra.mxu0 0.0
    %174 = vmatprep.subr.mxu0 0.0
    %175 = vmatpush1.msra.mxu0 0.0
    %176 = vmatprep.subr.mxu0 0.0
    %177 = vmatpush1.msra.mxu0 0.0
    %178 = vmatprep.subr.mxu0 0.0
    %179 = vmatpush1.msra.mxu0 0.0
    %180 = vmatprep.subr.mxu0 0.0
    %181 = vmatpush1.msra.mxu0 0.0
    %182 = vmatprep.subr.mxu0 0.0
    %183 = vmatpush1.msra.mxu0 0.0
    %184 = vmatprep.subr.mxu0 0.0
    %185 = vmatpush1.msra.mxu0 0.0
    %186 = vmatprep.subr.mxu0 0.0
    %187 = vmatpush1.msra.mxu0 0.0
    %188 = vmatprep.subr.mxu0 0.0
    %189 = vmatpush1.msra.mxu0 0.0
    %190 = vmatprep.subr.mxu0 0.0
    %191 = vmatpush1.msra.mxu0 0.0
    %192 = vmatprep.subr.mxu0 0.0
    %193 = vmatpush1.msra.mxu0 0.0
    %194 = vmatprep.subr.mxu0 0.0
    %195 = vmatpush1.msra.mxu0 0.0
    %196 = vmatprep.subr.mxu0 0.0
    %197 = vmatpush1.msra.mxu0 0.0
    %198 = vmatprep.subr.mxu0 0.0
    %199 = vmatpush1.msra.mxu0 0.0
    %200 = vmatprep.subr.mxu0 0.0
    %201 = vmatpush1.msra.mxu0 0.0
    %202 = vmatprep.subr.mxu0 0.0
    %203 = vmatpush1.msra.mxu0 0.0
    %204 = vmatprep.mubr.f32.mxu0 0.0
    %205 = vmatmul.mubr.f32.gmra.mrb[0].mxu0 %v41
    %v206 = vpop.f32.mrb[0].mxu0
    %v207 = vadd.f32 %v37, %v206
    %v208 = vpop.f32.mrb[0].mxu0
    %v209 = vadd.f32 %v37, %v208
    %210 = vdwg.mxu0
    %v211 = vmax.f32 %v207, 0.0
    %v212 = vmax.f32 %v209, 0.0
    %v215 = vrot.slane %v211, 7
    %v216 = vrot.slane %v212, 7
    %vm219 = vcmask 1040384
    %v220 = vsel %vm219, %v121, %v215
    %v221 = vsel %vm219, %v122, %v216
    %v222 = vpack.c.bf16 %v220, %v220
    %v223 = vpack.c.bf16 %v221, %v221
    %v224 = vld [vmem:[%s3] sm:$0xf]
    %v225 = vld [vmem:[%s3 + $0x4] sm:$0xf]
    %v226 = vld [vmem:[%s3 + $0x8] sm:$0xf]
    %v227 = vld [vmem:[%s3 + $0xc] sm:$0xf]
    %v228 = vld [vmem:[%s3 + $0x10] sm:$0xf]
    %v229 = vld [vmem:[%s3 + $0x14] sm:$0xf]
    %v230 = vld [vmem:[%s3 + $0x18] sm:$0xf]
    %v231 = vld [vmem:[%s3 + $0x1c] sm:$0xf]
    %v232 = vld [vmem:[%s3 + $0x20] sm:$0xf]
    %v233 = vld [vmem:[%s3 + $0x24] sm:$0xf]
    %v234 = vld [vmem:[%s3 + $0x28] sm:$0xf]
    %v235 = vld [vmem:[%s3 + $0x2c] sm:$0xf]
    %v236 = vld [vmem:[%s3 + $0x30] sm:$0xf]
    %v237 = vld [vmem:[%s3 + $0x34] sm:$0xf]
    %v238 = vld [vmem:[%s3 + $0x38] sm:$0xf]
    %v239 = vld [vmem:[%s3 + $0x3c] sm:$0xf]
    %v240 = vld [vmem:[%s3 + $0x40] sm:$0xf]
    %v241 = vld [vmem:[%s3 + $0x44] sm:$0xf]
    %v242 = vld [vmem:[%s3 + $0x48] sm:$0xf]
    %v243 = vld [vmem:[%s3 + $0x4c] sm:$0xf]
    %v244 = vld [vmem:[%s3 + $0x50] sm:$0xf]
    %v245 = vld [vmem:[%s3 + $0x54] sm:$0xf]
    %v246 = vld [vmem:[%s3 + $0x58] sm:$0xf]
    %v247 = vld [vmem:[%s3 + $0x5c] sm:$0xf]
    %v248 = vld [vmem:[%s3 + $0x60] sm:$0xf]
    %v249 = vld [vmem:[%s3 + $0x64] sm:$0xf]
    %v250 = vld [vmem:[%s3 + $0x68] sm:$0xf]
    %v251 = vld [vmem:[%s3 + $0x6c] sm:$0xf]
    %v252 = vld [vmem:[%s3 + $0x70] sm:$0xf]
    %v253 = vld [vmem:[%s3 + $0x74] sm:$0xf]
    %v254 = vld [vmem:[%s3 + $0x78] sm:$0xf]
    %v255 = vld [vmem:[%s3 + $0x7c] sm:$0xf]
    %v258 = vrot.slane %v121, 1
    %v259 = vrot.slane %v122, 1
    %v262 = vsel %vm219, %v258, %v211
    %v263 = vsel %vm219, %v259, %v212
    %v264 = vpack.c.bf16 %v262, %v262
    %v265 = vpack.c.bf16 %v263, %v263
    %s266 = scalar_lea.vmem %s3, 128
    %v267 = vld [vmem:[%s266] sm:$0xf]
    %v268 = vld [vmem:[%s266 + $0x4] sm:$0xf]
    %v269 = vld [vmem:[%s266 + $0x8] sm:$0xf]
    %v270 = vld [vmem:[%s266 + $0xc] sm:$0xf]
    %v271 = vld [vmem:[%s266 + $0x10] sm:$0xf]
    %v272 = vld [vmem:[%s266 + $0x14] sm:$0xf]
    %v273 = vld [vmem:[%s266 + $0x18] sm:$0xf]
    %v274 = vld [vmem:[%s266 + $0x1c] sm:$0xf]
    %v275 = vld [vmem:[%s266 + $0x20] sm:$0xf]
    %v276 = vld [vmem:[%s266 + $0x24] sm:$0xf]
    %v277 = vld [vmem:[%s266 + $0x28] sm:$0xf]
    %v278 = vld [vmem:[%s266 + $0x2c] sm:$0xf]
    %v279 = vld [vmem:[%s266 + $0x30] sm:$0xf]
    %v280 = vld [vmem:[%s266 + $0x34] sm:$0xf]
    %v281 = vld [vmem:[%s266 + $0x38] sm:$0xf]
    %v282 = vld [vmem:[%s266 + $0x3c] sm:$0xf]
    %v283 = vld [vmem:[%s266 + $0x40] sm:$0xf]
    %v284 = vld [vmem:[%s266 + $0x44] sm:$0xf]
    %v285 = vld [vmem:[%s266 + $0x48] sm:$0xf]
    %v286 = vld [vmem:[%s266 + $0x4c] sm:$0xf]
    %v287 = vld [vmem:[%s266 + $0x50] sm:$0xf]
    %v288 = vld [vmem:[%s266 + $0x54] sm:$0xf]
    %v289 = vld [vmem:[%s266 + $0x58] sm:$0xf]
    %v290 = vld [vmem:[%s266 + $0x5c] sm:$0xf]
    %v291 = vld [vmem:[%s266 + $0x60] sm:$0xf]
    %v292 = vld [vmem:[%s266 + $0x64] sm:$0xf]
    %v293 = vld [vmem:[%s266 + $0x68] sm:$0xf]
    %v294 = vld [vmem:[%s266 + $0x6c] sm:$0xf]
    %v295 = vld [vmem:[%s266 + $0x70] sm:$0xf]
    %v296 = vld [vmem:[%s266 + $0x74] sm:$0xf]
    %v297 = vld [vmem:[%s266 + $0x78] sm:$0xf]
    %v298 = vld [vmem:[%s266 + $0x7c] sm:$0xf]
    %v331 = vunpack.c.l.b16 %v267
    %v332 = vunpack.c.l.b16 %v268
    %v333 = vunpack.c.l.b16 %v269
    %v334 = vunpack.c.l.b16 %v270
    %v335 = vunpack.c.l.b16 %v271
    %v336 = vunpack.c.l.b16 %v272
    %v337 = vunpack.c.l.b16 %v273
    %v338 = vunpack.c.l.b16 %v274
    %v339 = vunpack.c.l.b16 %v275
    %v340 = vunpack.c.l.b16 %v276
    %v341 = vunpack.c.l.b16 %v277
    %v342 = vunpack.c.l.b16 %v278
    %v343 = vunpack.c.l.b16 %v279
    %v344 = vunpack.c.l.b16 %v280
    %v345 = vunpack.c.l.b16 %v281
    %v346 = vunpack.c.l.b16 %v282
    %v347 = vunpack.c.l.b16 %v283
    %v348 = vunpack.c.l.b16 %v284
    %v349 = vunpack.c.l.b16 %v285
    %v350 = vunpack.c.l.b16 %v286
    %v351 = vunpack.c.l.b16 %v287
    %v352 = vunpack.c.l.b16 %v288
    %v353 = vunpack.c.l.b16 %v289
    %v354 = vunpack.c.l.b16 %v290
    %v355 = vunpack.c.l.b16 %v291
    %v356 = vunpack.c.l.b16 %v292
    %v357 = vunpack.c.l.b16 %v293
    %v358 = vunpack.c.l.b16 %v294
    %v359 = vunpack.c.l.b16 %v295
    %v360 = vunpack.c.l.b16 %v296
    %v361 = vunpack.c.l.b16 %v297
    %v362 = vunpack.c.l.b16 %v298
    %v363 = vpack.c.b16 %v332, %v331
    %v364 = vpack.c.b16 %v334, %v333
    %v365 = vpack.c.b16 %v336, %v335
    %v366 = vpack.c.b16 %v338, %v337
    %v367 = vpack.c.b16 %v340, %v339
    %v368 = vpack.c.b16 %v342, %v341
    %v369 = vpack.c.b16 %v344, %v343
    %v370 = vpack.c.b16 %v346, %v345
    %v371 = vpack.c.b16 %v348, %v347
    %v372 = vpack.c.b16 %v350, %v349
    %v373 = vpack.c.b16 %v352, %v351
    %v374 = vpack.c.b16 %v354, %v353
    %v375 = vpack.c.b16 %v356, %v355
    %v376 = vpack.c.b16 %v358, %v357
    %v377 = vpack.c.b16 %v360, %v359
    %v378 = vpack.c.b16 %v362, %v361
    %395 = vmatprep.subr.bf16.mxu0 0
    %396 = vmatpush1.bf16.msra.mxu0 %v363
    %397 = vmatprep.subr.bf16.mxu0 0
    %398 = vmatpush1.bf16.msra.mxu0 %v364
    %399 = vmatprep.subr.bf16.mxu0 0
    %400 = vmatpush1.bf16.msra.mxu0 %v365
    %401 = vmatprep.subr.bf16.mxu0 0
    %402 = vmatpush1.bf16.msra.mxu0 %v366
    %403 = vmatprep.subr.bf16.mxu0 0
    %404 = vmatpush1.bf16.msra.mxu0 %v367
    %405 = vmatprep.subr.bf16.mxu0 0
    %406 = vmatpush1.bf16.msra.mxu0 %v368
    %407 = vmatprep.subr.bf16.mxu0 0
    %408 = vmatpush1.bf16.msra.mxu0 %v369
    %409 = vmatprep.subr.bf16.mxu0 0
    %410 = vmatpush1.bf16.msra.mxu0 %v370
    %411 = vmatprep.subr.bf16.mxu0 0
    %412 = vmatpush1.bf16.msra.mxu0 %v371
    %413 = vmatprep.subr.bf16.mxu0 0
    %414 = vmatpush1.bf16.msra.mxu0 %v372
    %415 = vmatprep.subr.bf16.mxu0 0
    %416 = vmatpush1.bf16.msra.mxu0 %v373
    %417 = vmatprep.subr.bf16.mxu0 0
    %418 = vmatpush1.bf16.msra.mxu0 %v374
    %419 = vmatprep.subr.bf16.mxu0 0
    %420 = vmatpush1.bf16.msra.mxu0 %v375
    %421 = vmatprep.subr.bf16.mxu0 0
    %422 = vmatpush1.bf16.msra.mxu0 %v376
    %423 = vmatprep.subr.bf16.mxu0 0
    %424 = vmatpush1.bf16.msra.mxu0 %v377
    %425 = vmatprep.subr.bf16.mxu0 0
    %426 = vmatpush1.bf16.msra.mxu0 %v378
    %427 = vmatprep.mubr.bf16.mxu0 %v265
    %428 = vmatmul.mubr.bf16.gmra.mrb[0].mxu0 %v264
    %v429 = vpop.f32.mrb[0].mxu0
    %v430 = vadd.f32 0.0, %v429
    %v431 = vpop.f32.mrb[0].mxu0
    %v432 = vpop.f32.mrb[0].mxu0
    %v433 = vpop.f32.mrb[0].mxu0
    %434 = vdwg.mxu0
    %v467 = vunpack.c.l.b16 %v224
    %v468 = vunpack.c.l.b16 %v225
    %v469 = vunpack.c.l.b16 %v226
    %v470 = vunpack.c.l.b16 %v227
    %v471 = vunpack.c.l.b16 %v228
    %v472 = vunpack.c.l.b16 %v229
    %v473 = vunpack.c.l.b16 %v230
    %v474 = vunpack.c.l.b16 %v231
    %v475 = vunpack.c.l.b16 %v232
    %v476 = vunpack.c.l.b16 %v233
    %v477 = vunpack.c.l.b16 %v234
    %v478 = vunpack.c.l.b16 %v235
    %v479 = vunpack.c.l.b16 %v236
    %v480 = vunpack.c.l.b16 %v237
    %v481 = vunpack.c.l.b16 %v238
    %v482 = vunpack.c.l.b16 %v239
    %v483 = vunpack.c.l.b16 %v240
    %v484 = vunpack.c.l.b16 %v241
    %v485 = vunpack.c.l.b16 %v242
    %v486 = vunpack.c.l.b16 %v243
    %v487 = vunpack.c.l.b16 %v244
    %v488 = vunpack.c.l.b16 %v245
    %v489 = vunpack.c.l.b16 %v246
    %v490 = vunpack.c.l.b16 %v247
    %v491 = vunpack.c.l.b16 %v248
    %v492 = vunpack.c.l.b16 %v249
    %v493 = vunpack.c.l.b16 %v250
    %v494 = vunpack.c.l.b16 %v251
    %v495 = vunpack.c.l.b16 %v252
    %v496 = vunpack.c.l.b16 %v253
    %v497 = vunpack.c.l.b16 %v254
    %v498 = vunpack.c.l.b16 %v255
    %v499 = vpack.c.b16 %v468, %v467
    %v500 = vpack.c.b16 %v470, %v469
    %v501 = vpack.c.b16 %v472, %v471
    %v502 = vpack.c.b16 %v474, %v473
    %v503 = vpack.c.b16 %v476, %v475
    %v504 = vpack.c.b16 %v478, %v477
    %v505 = vpack.c.b16 %v480, %v479
    %v506 = vpack.c.b16 %v482, %v481
    %v507 = vpack.c.b16 %v484, %v483
    %v508 = vpack.c.b16 %v486, %v485
    %v509 = vpack.c.b16 %v488, %v487
    %v510 = vpack.c.b16 %v490, %v489
    %v511 = vpack.c.b16 %v492, %v491
    %v512 = vpack.c.b16 %v494, %v493
    %v513 = vpack.c.b16 %v496, %v495
    %v514 = vpack.c.b16 %v498, %v497
    %531 = vmatprep.subr.bf16.mxu0 0
    %532 = vmatpush1.bf16.msra.mxu0 %v499
    %533 = vmatprep.subr.bf16.mxu0 0
    %534 = vmatpush1.bf16.msra.mxu0 %v500
    %535 = vmatprep.subr.bf16.mxu0 0
    %536 = vmatpush1.bf16.msra.mxu0 %v501
    %537 = vmatprep.subr.bf16.mxu0 0
    %538 = vmatpush1.bf16.msra.mxu0 %v502
    %539 = vmatprep.subr.bf16.mxu0 0
    %540 = vmatpush1.bf16.msra.mxu0 %v503
    %541 = vmatprep.subr.bf16.mxu0 0
    %542 = vmatpush1.bf16.msra.mxu0 %v504
    %543 = vmatprep.subr.bf16.mxu0 0
    %544 = vmatpush1.bf16.msra.mxu0 %v505
    %545 = vmatprep.subr.bf16.mxu0 0
    %546 = vmatpush1.bf16.msra.mxu0 %v506
    %547 = vmatprep.subr.bf16.mxu0 0
    %548 = vmatpush1.bf16.msra.mxu0 %v507
    %549 = vmatprep.subr.bf16.mxu0 0
    %550 = vmatpush1.bf16.msra.mxu0 %v508
    %551 = vmatprep.subr.bf16.mxu0 0
    %552 = vmatpush1.bf16.msra.mxu0 %v509
    %553 = vmatprep.subr.bf16.mxu0 0
    %554 = vmatpush1.bf16.msra.mxu0 %v510
    %555 = vmatprep.subr.bf16.mxu0 0
    %556 = vmatpush1.bf16.msra.mxu0 %v511
    %557 = vmatprep.subr.bf16.mxu0 0
    %558 = vmatpush1.bf16.msra.mxu0 %v512
    %559 = vmatprep.subr.bf16.mxu0 0
    %560 = vmatpush1.bf16.msra.mxu0 %v513
    %561 = vmatprep.subr.bf16.mxu0 0
    %562 = vmatpush1.bf16.msra.mxu0 %v514
    %563 = vmatprep.mubr.bf16.mxu0 %v223
    %564 = vmatmul.mubr.bf16.gmra.mrb[0].mxu0 %v222
    %v565 = vpop.f32.mrb[0].mxu0
    %v566 = vadd.f32 %v430, %v565
    %v567 = vpop.f32.mrb[0].mxu0
    %v568 = vpop.f32.mrb[0].mxu0
    %v569 = vpop.f32.mrb[0].mxu0
    %570 = vdwg.mxu0
    %v571 = vrot.slane %v121, 2
    %v572 = vrot.slane %v122, 2
    %v575 = vrot.slane %v211, 1
    %v576 = vrot.slane %v212, 1
    %v579 = vsel %vm219, %v571, %v575
    %v580 = vsel %vm219, %v572, %v576
    %v581 = vpack.c.bf16 %v579, %v579
    %v582 = vpack.c.bf16 %v580, %v580
    %s583 = scalar_lea.vmem %s3, 256
    %v584 = vld [vmem:[%s583] sm:$0xf]
    %v585 = vld [vmem:[%s583 + $0x4] sm:$0xf]
    %v586 = vld [vmem:[%s583 + $0x8] sm:$0xf]
    %v587 = vld [vmem:[%s583 + $0xc] sm:$0xf]
    %v588 = vld [vmem:[%s583 + $0x10] sm:$0xf]
    %v589 = vld [vmem:[%s583 + $0x14] sm:$0xf]
    %v590 = vld [vmem:[%s583 + $0x18] sm:$0xf]
    %v591 = vld [vmem:[%s583 + $0x1c] sm:$0xf]
    %v592 = vld [vmem:[%s583 + $0x20] sm:$0xf]
    %v593 = vld [vmem:[%s583 + $0x24] sm:$0xf]
    %v594 = vld [vmem:[%s583 + $0x28] sm:$0xf]
    %v595 = vld [vmem:[%s583 + $0x2c] sm:$0xf]
    %v596 = vld [vmem:[%s583 + $0x30] sm:$0xf]
    %v597 = vld [vmem:[%s583 + $0x34] sm:$0xf]
    %v598 = vld [vmem:[%s583 + $0x38] sm:$0xf]
    %v599 = vld [vmem:[%s583 + $0x3c] sm:$0xf]
    %v600 = vld [vmem:[%s583 + $0x40] sm:$0xf]
    %v601 = vld [vmem:[%s583 + $0x44] sm:$0xf]
    %v602 = vld [vmem:[%s583 + $0x48] sm:$0xf]
    %v603 = vld [vmem:[%s583 + $0x4c] sm:$0xf]
    %v604 = vld [vmem:[%s583 + $0x50] sm:$0xf]
    %v605 = vld [vmem:[%s583 + $0x54] sm:$0xf]
    %v606 = vld [vmem:[%s583 + $0x58] sm:$0xf]
    %v607 = vld [vmem:[%s583 + $0x5c] sm:$0xf]
    %v608 = vld [vmem:[%s583 + $0x60] sm:$0xf]
    %v609 = vld [vmem:[%s583 + $0x64] sm:$0xf]
    %v610 = vld [vmem:[%s583 + $0x68] sm:$0xf]
    %v611 = vld [vmem:[%s583 + $0x6c] sm:$0xf]
    %v612 = vld [vmem:[%s583 + $0x70] sm:$0xf]
    %v613 = vld [vmem:[%s583 + $0x74] sm:$0xf]
    %v614 = vld [vmem:[%s583 + $0x78] sm:$0xf]
    %v615 = vld [vmem:[%s583 + $0x7c] sm:$0xf]
    %v648 = vunpack.c.l.b16 %v584
    %v649 = vunpack.c.l.b16 %v585
    %v650 = vunpack.c.l.b16 %v586
    %v651 = vunpack.c.l.b16 %v587
    %v652 = vunpack.c.l.b16 %v588
    %v653 = vunpack.c.l.b16 %v589
    %v654 = vunpack.c.l.b16 %v590
    %v655 = vunpack.c.l.b16 %v591
    %v656 = vunpack.c.l.b16 %v592
    %v657 = vunpack.c.l.b16 %v593
    %v658 = vunpack.c.l.b16 %v594
    %v659 = vunpack.c.l.b16 %v595
    %v660 = vunpack.c.l.b16 %v596
    %v661 = vunpack.c.l.b16 %v597
    %v662 = vunpack.c.l.b16 %v598
    %v663 = vunpack.c.l.b16 %v599
    %v664 = vunpack.c.l.b16 %v600
    %v665 = vunpack.c.l.b16 %v601
    %v666 = vunpack.c.l.b16 %v602
    %v667 = vunpack.c.l.b16 %v603
    %v668 = vunpack.c.l.b16 %v604
    %v669 = vunpack.c.l.b16 %v605
    %v670 = vunpack.c.l.b16 %v606
    %v671 = vunpack.c.l.b16 %v607
    %v672 = vunpack.c.l.b16 %v608
    %v673 = vunpack.c.l.b16 %v609
    %v674 = vunpack.c.l.b16 %v610
    %v675 = vunpack.c.l.b16 %v611
    %v676 = vunpack.c.l.b16 %v612
    %v677 = vunpack.c.l.b16 %v613
    %v678 = vunpack.c.l.b16 %v614
    %v679 = vunpack.c.l.b16 %v615
    %v680 = vpack.c.b16 %v649, %v648
    %v681 = vpack.c.b16 %v651, %v650
    %v682 = vpack.c.b16 %v653, %v652
    %v683 = vpack.c.b16 %v655, %v654
    %v684 = vpack.c.b16 %v657, %v656
    %v685 = vpack.c.b16 %v659, %v658
    %v686 = vpack.c.b16 %v661, %v660
    %v687 = vpack.c.b16 %v663, %v662
    %v688 = vpack.c.b16 %v665, %v664
    %v689 = vpack.c.b16 %v667, %v666
    %v690 = vpack.c.b16 %v669, %v668
    %v691 = vpack.c.b16 %v671, %v670
    %v692 = vpack.c.b16 %v673, %v672
    %v693 = vpack.c.b16 %v675, %v674
    %v694 = vpack.c.b16 %v677, %v676
    %v695 = vpack.c.b16 %v679, %v678
    %712 = vmatprep.subr.bf16.mxu0 0
    %713 = vmatpush1.bf16.msra.mxu0 %v680
    %714 = vmatprep.subr.bf16.mxu0 0
    %715 = vmatpush1.bf16.msra.mxu0 %v681
    %716 = vmatprep.subr.bf16.mxu0 0
    %717 = vmatpush1.bf16.msra.mxu0 %v682
    %718 = vmatprep.subr.bf16.mxu0 0
    %719 = vmatpush1.bf16.msra.mxu0 %v683
    %720 = vmatprep.subr.bf16.mxu0 0
    %721 = vmatpush1.bf16.msra.mxu0 %v684
    %722 = vmatprep.subr.bf16.mxu0 0
    %723 = vmatpush1.bf16.msra.mxu0 %v685
    %724 = vmatprep.subr.bf16.mxu0 0
    %725 = vmatpush1.bf16.msra.mxu0 %v686
    %726 = vmatprep.subr.bf16.mxu0 0
    %727 = vmatpush1.bf16.msra.mxu0 %v687
    %728 = vmatprep.subr.bf16.mxu0 0
    %729 = vmatpush1.bf16.msra.mxu0 %v688
    %730 = vmatprep.subr.bf16.mxu0 0
    %731 = vmatpush1.bf16.msra.mxu0 %v689
    %732 = vmatprep.subr.bf16.mxu0 0
    %733 = vmatpush1.bf16.msra.mxu0 %v690
    %734 = vmatprep.subr.bf16.mxu0 0
    %735 = vmatpush1.bf16.msra.mxu0 %v691
    %736 = vmatprep.subr.bf16.mxu0 0
    %737 = vmatpush1.bf16.msra.mxu0 %v692
    %738 = vmatprep.subr.bf16.mxu0 0
    %739 = vmatpush1.bf16.msra.mxu0 %v693
    %740 = vmatprep.subr.bf16.mxu0 0
    %741 = vmatpush1.bf16.msra.mxu0 %v694
    %742 = vmatprep.subr.bf16.mxu0 0
    %743 = vmatpush1.bf16.msra.mxu0 %v695
    %744 = vmatprep.mubr.bf16.mxu0 %v582
    %745 = vmatmul.mubr.bf16.gmra.mrb[0].mxu0 %v581
    %v746 = vpop.f32.mrb[0].mxu0
    %v747 = vadd.f32 0.0, %v746
    %v748 = vpop.f32.mrb[0].mxu0
    %v749 = vpop.f32.mrb[0].mxu0
    %v750 = vpop.f32.mrb[0].mxu0
    %751 = vdwg.mxu0
    %v752 = vadd.f32 %v566, %v747
    %v753 = vrot.slane %v121, 3
    %v754 = vrot.slane %v122, 3
    %v757 = vrot.slane %v211, 2
    %v758 = vrot.slane %v212, 2
    %v761 = vsel %vm219, %v753, %v757
    %v762 = vsel %vm219, %v754, %v758
    %v763 = vpack.c.bf16 %v761, %v761
    %v764 = vpack.c.bf16 %v762, %v762
    %s765 = scalar_lea.vmem %s3, 384
    %v766 = vld [vmem:[%s765] sm:$0xf]
    %v767 = vld [vmem:[%s765 + $0x4] sm:$0xf]
    %v768 = vld [vmem:[%s765 + $0x8] sm:$0xf]
    %v769 = vld [vmem:[%s765 + $0xc] sm:$0xf]
    %v770 = vld [vmem:[%s765 + $0x10] sm:$0xf]
    %v771 = vld [vmem:[%s765 + $0x14] sm:$0xf]
    %v772 = vld [vmem:[%s765 + $0x18] sm:$0xf]
    %v773 = vld [vmem:[%s765 + $0x1c] sm:$0xf]
    %v774 = vld [vmem:[%s765 + $0x20] sm:$0xf]
    %v775 = vld [vmem:[%s765 + $0x24] sm:$0xf]
    %v776 = vld [vmem:[%s765 + $0x28] sm:$0xf]
    %v777 = vld [vmem:[%s765 + $0x2c] sm:$0xf]
    %v778 = vld [vmem:[%s765 + $0x30] sm:$0xf]
    %v779 = vld [vmem:[%s765 + $0x34] sm:$0xf]
    %v780 = vld [vmem:[%s765 + $0x38] sm:$0xf]
    %v781 = vld [vmem:[%s765 + $0x3c] sm:$0xf]
    %v782 = vld [vmem:[%s765 + $0x40] sm:$0xf]
    %v783 = vld [vmem:[%s765 + $0x44] sm:$0xf]
    %v784 = vld [vmem:[%s765 + $0x48] sm:$0xf]
    %v785 = vld [vmem:[%s765 + $0x4c] sm:$0xf]
    %v786 = vld [vmem:[%s765 + $0x50] sm:$0xf]
    %v787 = vld [vmem:[%s765 + $0x54] sm:$0xf]
    %v788 = vld [vmem:[%s765 + $0x58] sm:$0xf]
    %v789 = vld [vmem:[%s765 + $0x5c] sm:$0xf]
    %v790 = vld [vmem:[%s765 + $0x60] sm:$0xf]
    %v791 = vld [vmem:[%s765 + $0x64] sm:$0xf]
    %v792 = vld [vmem:[%s765 + $0x68] sm:$0xf]
    %v793 = vld [vmem:[%s765 + $0x6c] sm:$0xf]
    %v794 = vld [vmem:[%s765 + $0x70] sm:$0xf]
    %v795 = vld [vmem:[%s765 + $0x74] sm:$0xf]
    %v796 = vld [vmem:[%s765 + $0x78] sm:$0xf]
    %v797 = vld [vmem:[%s765 + $0x7c] sm:$0xf]
    %v830 = vunpack.c.l.b16 %v766
    %v831 = vunpack.c.l.b16 %v767
    %v832 = vunpack.c.l.b16 %v768
    %v833 = vunpack.c.l.b16 %v769
    %v834 = vunpack.c.l.b16 %v770
    %v835 = vunpack.c.l.b16 %v771
    %v836 = vunpack.c.l.b16 %v772
    %v837 = vunpack.c.l.b16 %v773
    %v838 = vunpack.c.l.b16 %v774
    %v839 = vunpack.c.l.b16 %v775
    %v840 = vunpack.c.l.b16 %v776
    %v841 = vunpack.c.l.b16 %v777
    %v842 = vunpack.c.l.b16 %v778
    %v843 = vunpack.c.l.b16 %v779
    %v844 = vunpack.c.l.b16 %v780
    %v845 = vunpack.c.l.b16 %v781
    %v846 = vunpack.c.l.b16 %v782
    %v847 = vunpack.c.l.b16 %v783
    %v848 = vunpack.c.l.b16 %v784
    %v849 = vunpack.c.l.b16 %v785
    %v850 = vunpack.c.l.b16 %v786
    %v851 = vunpack.c.l.b16 %v787
    %v852 = vunpack.c.l.b16 %v788
    %v853 = vunpack.c.l.b16 %v789
    %v854 = vunpack.c.l.b16 %v790
    %v855 = vunpack.c.l.b16 %v791
    %v856 = vunpack.c.l.b16 %v792
    %v857 = vunpack.c.l.b16 %v793
    %v858 = vunpack.c.l.b16 %v794
    %v859 = vunpack.c.l.b16 %v795
    %v860 = vunpack.c.l.b16 %v796
    %v861 = vunpack.c.l.b16 %v797
    %v862 = vpack.c.b16 %v831, %v830
    %v863 = vpack.c.b16 %v833, %v832
    %v864 = vpack.c.b16 %v835, %v834
    %v865 = vpack.c.b16 %v837, %v836
    %v866 = vpack.c.b16 %v839, %v838
    %v867 = vpack.c.b16 %v841, %v840
    %v868 = vpack.c.b16 %v843, %v842
    %v869 = vpack.c.b16 %v845, %v844
    %v870 = vpack.c.b16 %v847, %v846
    %v871 = vpack.c.b16 %v849, %v848
    %v872 = vpack.c.b16 %v851, %v850
    %v873 = vpack.c.b16 %v853, %v852
    %v874 = vpack.c.b16 %v855, %v854
    %v875 = vpack.c.b16 %v857, %v856
    %v876 = vpack.c.b16 %v859, %v858
    %v877 = vpack.c.b16 %v861, %v860
    %894 = vmatprep.subr.bf16.mxu0 0
    %895 = vmatpush1.bf16.msra.mxu0 %v862
    %896 = vmatprep.subr.bf16.mxu0 0
    %897 = vmatpush1.bf16.msra.mxu0 %v863
    %898 = vmatprep.subr.bf16.mxu0 0
    %899 = vmatpush1.bf16.msra.mxu0 %v864
    %900 = vmatprep.subr.bf16.mxu0 0
    %901 = vmatpush1.bf16.msra.mxu0 %v865
    %902 = vmatprep.subr.bf16.mxu0 0
    %903 = vmatpush1.bf16.msra.mxu0 %v866
    %904 = vmatprep.subr.bf16.mxu0 0
    %905 = vmatpush1.bf16.msra.mxu0 %v867
    %906 = vmatprep.subr.bf16.mxu0 0
    %907 = vmatpush1.bf16.msra.mxu0 %v868
    %908 = vmatprep.subr.bf16.mxu0 0
    %909 = vmatpush1.bf16.msra.mxu0 %v869
    %910 = vmatprep.subr.bf16.mxu0 0
    %911 = vmatpush1.bf16.msra.mxu0 %v870
    %912 = vmatprep.subr.bf16.mxu0 0
    %913 = vmatpush1.bf16.msra.mxu0 %v871
    %914 = vmatprep.subr.bf16.mxu0 0
    %915 = vmatpush1.bf16.msra.mxu0 %v872
    %916 = vmatprep.subr.bf16.mxu0 0
    %917 = vmatpush1.bf16.msra.mxu0 %v873
    %918 = vmatprep.subr.bf16.mxu0 0
    %919 = vmatpush1.bf16.msra.mxu0 %v874
    %920 = vmatprep.subr.bf16.mxu0 0
    %921 = vmatpush1.bf16.msra.mxu0 %v875
    %922 = vmatprep.subr.bf16.mxu0 0
    %923 = vmatpush1.bf16.msra.mxu0 %v876
    %924 = vmatprep.subr.bf16.mxu0 0
    %925 = vmatpush1.bf16.msra.mxu0 %v877
    %926 = vmatprep.mubr.bf16.mxu0 %v764
    %927 = vmatmul.mubr.bf16.gmra.mrb[0].mxu0 %v763
    %v928 = vpop.f32.mrb[0].mxu0
    %v929 = vadd.f32 0.0, %v928
    %v930 = vpop.f32.mrb[0].mxu0
    %v931 = vpop.f32.mrb[0].mxu0
    %v932 = vpop.f32.mrb[0].mxu0
    %933 = vdwg.mxu0
    %v934 = vadd.f32 %v752, %v929
    %v935 = vrot.slane %v121, 4
    %v936 = vrot.slane %v122, 4
    %v939 = vrot.slane %v211, 3
    %v940 = vrot.slane %v212, 3
    %v943 = vsel %vm219, %v935, %v939
    %v944 = vsel %vm219, %v936, %v940
    %v945 = vpack.c.bf16 %v943, %v943
    %v946 = vpack.c.bf16 %v944, %v944
    %s947 = scalar_lea.vmem %s3, 512
    %v948 = vld [vmem:[%s947] sm:$0xf]
    %v949 = vld [vmem:[%s947 + $0x4] sm:$0xf]
    %v950 = vld [vmem:[%s947 + $0x8] sm:$0xf]
    %v951 = vld [vmem:[%s947 + $0xc] sm:$0xf]
    %v952 = vld [vmem:[%s947 + $0x10] sm:$0xf]
    %v953 = vld [vmem:[%s947 + $0x14] sm:$0xf]
    %v954 = vld [vmem:[%s947 + $0x18] sm:$0xf]
    %v955 = vld [vmem:[%s947 + $0x1c] sm:$0xf]
    %v956 = vld [vmem:[%s947 + $0x20] sm:$0xf]
    %v957 = vld [vmem:[%s947 + $0x24] sm:$0xf]
    %v958 = vld [vmem:[%s947 + $0x28] sm:$0xf]
    %v959 = vld [vmem:[%s947 + $0x2c] sm:$0xf]
    %v960 = vld [vmem:[%s947 + $0x30] sm:$0xf]
    %v961 = vld [vmem:[%s947 + $0x34] sm:$0xf]
    %v962 = vld [vmem:[%s947 + $0x38] sm:$0xf]
    %v963 = vld [vmem:[%s947 + $0x3c] sm:$0xf]
    %v964 = vld [vmem:[%s947 + $0x40] sm:$0xf]
    %v965 = vld [vmem:[%s947 + $0x44] sm:$0xf]
    %v966 = vld [vmem:[%s947 + $0x48] sm:$0xf]
    %v967 = vld [vmem:[%s947 + $0x4c] sm:$0xf]
    %v968 = vld [vmem:[%s947 + $0x50] sm:$0xf]
    %v969 = vld [vmem:[%s947 + $0x54] sm:$0xf]
    %v970 = vld [vmem:[%s947 + $0x58] sm:$0xf]
    %v971 = vld [vmem:[%s947 + $0x5c] sm:$0xf]
    %v972 = vld [vmem:[%s947 + $0x60] sm:$0xf]
    %v973 = vld [vmem:[%s947 + $0x64] sm:$0xf]
    %v974 = vld [vmem:[%s947 + $0x68] sm:$0xf]
    %v975 = vld [vmem:[%s947 + $0x6c] sm:$0xf]
    %v976 = vld [vmem:[%s947 + $0x70] sm:$0xf]
    %v977 = vld [vmem:[%s947 + $0x74] sm:$0xf]
    %v978 = vld [vmem:[%s947 + $0x78] sm:$0xf]
    %v979 = vld [vmem:[%s947 + $0x7c] sm:$0xf]
    %v1012 = vunpack.c.l.b16 %v948
    %v1013 = vunpack.c.l.b16 %v949
    %v1014 = vunpack.c.l.b16 %v950
    %v1015 = vunpack.c.l.b16 %v951
    %v1016 = vunpack.c.l.b16 %v952
    %v1017 = vunpack.c.l.b16 %v953
    %v1018 = vunpack.c.l.b16 %v954
    %v1019 = vunpack.c.l.b16 %v955
    %v1020 = vunpack.c.l.b16 %v956
    %v1021 = vunpack.c.l.b16 %v957
    %v1022 = vunpack.c.l.b16 %v958
    %v1023 = vunpack.c.l.b16 %v959
    %v1024 = vunpack.c.l.b16 %v960
    %v1025 = vunpack.c.l.b16 %v961
    %v1026 = vunpack.c.l.b16 %v962
    %v1027 = vunpack.c.l.b16 %v963
    %v1028 = vunpack.c.l.b16 %v964
    %v1029 = vunpack.c.l.b16 %v965
    %v1030 = vunpack.c.l.b16 %v966
    %v1031 = vunpack.c.l.b16 %v967
    %v1032 = vunpack.c.l.b16 %v968
    %v1033 = vunpack.c.l.b16 %v969
    %v1034 = vunpack.c.l.b16 %v970
    %v1035 = vunpack.c.l.b16 %v971
    %v1036 = vunpack.c.l.b16 %v972
    %v1037 = vunpack.c.l.b16 %v973
    %v1038 = vunpack.c.l.b16 %v974
    %v1039 = vunpack.c.l.b16 %v975
    %v1040 = vunpack.c.l.b16 %v976
    %v1041 = vunpack.c.l.b16 %v977
    %v1042 = vunpack.c.l.b16 %v978
    %v1043 = vunpack.c.l.b16 %v979
    %v1044 = vpack.c.b16 %v1013, %v1012
    %v1045 = vpack.c.b16 %v1015, %v1014
    %v1046 = vpack.c.b16 %v1017, %v1016
    %v1047 = vpack.c.b16 %v1019, %v1018
    %v1048 = vpack.c.b16 %v1021, %v1020
    %v1049 = vpack.c.b16 %v1023, %v1022
    %v1050 = vpack.c.b16 %v1025, %v1024
    %v1051 = vpack.c.b16 %v1027, %v1026
    %v1052 = vpack.c.b16 %v1029, %v1028
    %v1053 = vpack.c.b16 %v1031, %v1030
    %v1054 = vpack.c.b16 %v1033, %v1032
    %v1055 = vpack.c.b16 %v1035, %v1034
    %v1056 = vpack.c.b16 %v1037, %v1036
    %v1057 = vpack.c.b16 %v1039, %v1038
    %v1058 = vpack.c.b16 %v1041, %v1040
    %v1059 = vpack.c.b16 %v1043, %v1042
    %1076 = vmatprep.subr.bf16.mxu0 0
    %1077 = vmatpush1.bf16.msra.mxu0 %v1044
    %1078 = vmatprep.subr.bf16.mxu0 0
    %1079 = vmatpush1.bf16.msra.mxu0 %v1045
    %1080 = vmatprep.subr.bf16.mxu0 0
    %1081 = vmatpush1.bf16.msra.mxu0 %v1046
    %1082 = vmatprep.subr.bf16.mxu0 0
    %1083 = vmatpush1.bf16.msra.mxu0 %v1047
    %1084 = vmatprep.subr.bf16.mxu0 0
    %1085 = vmatpush1.bf16.msra.mxu0 %v1048
    %1086 = vmatprep.subr.bf16.mxu0 0
    %1087 = vmatpush1.bf16.msra.mxu0 %v1049
    %1088 = vmatprep.subr.bf16.mxu0 0
    %1089 = vmatpush1.bf16.msra.mxu0 %v1050
    %1090 = vmatprep.subr.bf16.mxu0 0
    %1091 = vmatpush1.bf16.msra.mxu0 %v1051
    %1092 = vmatprep.subr.bf16.mxu0 0
    %1093 = vmatpush1.bf16.msra.mxu0 %v1052
    %1094 = vmatprep.subr.bf16.mxu0 0
    %1095 = vmatpush1.bf16.msra.mxu0 %v1053
    %1096 = vmatprep.subr.bf16.mxu0 0
    %1097 = vmatpush1.bf16.msra.mxu0 %v1054
    %1098 = vmatprep.subr.bf16.mxu0 0
    %1099 = vmatpush1.bf16.msra.mxu0 %v1055
    %1100 = vmatprep.subr.bf16.mxu0 0
    %1101 = vmatpush1.bf16.msra.mxu0 %v1056
    %1102 = vmatprep.subr.bf16.mxu0 0
    %1103 = vmatpush1.bf16.msra.mxu0 %v1057
    %1104 = vmatprep.subr.bf16.mxu0 0
    %1105 = vmatpush1.bf16.msra.mxu0 %v1058
    %1106 = vmatprep.subr.bf16.mxu0 0
    %1107 = vmatpush1.bf16.msra.mxu0 %v1059
    %1108 = vmatprep.mubr.bf16.mxu0 %v946
    %1109 = vmatmul.mubr.bf16.gmra.mrb[0].mxu0 %v945
    %v1110 = vpop.f32.mrb[0].mxu0
    %v1111 = vadd.f32 0.0, %v1110
    %v1112 = vpop.f32.mrb[0].mxu0
    %v1113 = vpop.f32.mrb[0].mxu0
    %v1114 = vpop.f32.mrb[0].mxu0
    %1115 = vdwg.mxu0
    %v1116 = vadd.f32 %v934, %v1111
    %v1117 = vrot.slane %v121, 5
    %v1118 = vrot.slane %v122, 5
    %v1121 = vrot.slane %v211, 4
    %v1122 = vrot.slane %v212, 4
    %v1125 = vsel %vm219, %v1117, %v1121
    %v1126 = vsel %vm219, %v1118, %v1122
    %v1127 = vpack.c.bf16 %v1125, %v1125
    %v1128 = vpack.c.bf16 %v1126, %v1126
    %s1129 = scalar_lea.vmem %s3, 640
    %v1130 = vld [vmem:[%s1129] sm:$0xf]
    %v1131 = vld [vmem:[%s1129 + $0x4] sm:$0xf]
    %v1132 = vld [vmem:[%s1129 + $0x8] sm:$0xf]
    %v1133 = vld [vmem:[%s1129 + $0xc] sm:$0xf]
    %v1134 = vld [vmem:[%s1129 + $0x10] sm:$0xf]
    %v1135 = vld [vmem:[%s1129 + $0x14] sm:$0xf]
    %v1136 = vld [vmem:[%s1129 + $0x18] sm:$0xf]
    %v1137 = vld [vmem:[%s1129 + $0x1c] sm:$0xf]
    %v1138 = vld [vmem:[%s1129 + $0x20] sm:$0xf]
    %v1139 = vld [vmem:[%s1129 + $0x24] sm:$0xf]
    %v1140 = vld [vmem:[%s1129 + $0x28] sm:$0xf]
    %v1141 = vld [vmem:[%s1129 + $0x2c] sm:$0xf]
    %v1142 = vld [vmem:[%s1129 + $0x30] sm:$0xf]
    %v1143 = vld [vmem:[%s1129 + $0x34] sm:$0xf]
    %v1144 = vld [vmem:[%s1129 + $0x38] sm:$0xf]
    %v1145 = vld [vmem:[%s1129 + $0x3c] sm:$0xf]
    %v1146 = vld [vmem:[%s1129 + $0x40] sm:$0xf]
    %v1147 = vld [vmem:[%s1129 + $0x44] sm:$0xf]
    %v1148 = vld [vmem:[%s1129 + $0x48] sm:$0xf]
    %v1149 = vld [vmem:[%s1129 + $0x4c] sm:$0xf]
    %v1150 = vld [vmem:[%s1129 + $0x50] sm:$0xf]
    %v1151 = vld [vmem:[%s1129 + $0x54] sm:$0xf]
    %v1152 = vld [vmem:[%s1129 + $0x58] sm:$0xf]
    %v1153 = vld [vmem:[%s1129 + $0x5c] sm:$0xf]
    %v1154 = vld [vmem:[%s1129 + $0x60] sm:$0xf]
    %v1155 = vld [vmem:[%s1129 + $0x64] sm:$0xf]
    %v1156 = vld [vmem:[%s1129 + $0x68] sm:$0xf]
    %v1157 = vld [vmem:[%s1129 + $0x6c] sm:$0xf]
    %v1158 = vld [vmem:[%s1129 + $0x70] sm:$0xf]
    %v1159 = vld [vmem:[%s1129 + $0x74] sm:$0xf]
    %v1160 = vld [vmem:[%s1129 + $0x78] sm:$0xf]
    %v1161 = vld [vmem:[%s1129 + $0x7c] sm:$0xf]
    %v1194 = vunpack.c.l.b16 %v1130
    %v1195 = vunpack.c.l.b16 %v1131
    %v1196 = vunpack.c.l.b16 %v1132
    %v1197 = vunpack.c.l.b16 %v1133
    %v1198 = vunpack.c.l.b16 %v1134
    %v1199 = vunpack.c.l.b16 %v1135
    %v1200 = vunpack.c.l.b16 %v1136
    %v1201 = vunpack.c.l.b16 %v1137
    %v1202 = vunpack.c.l.b16 %v1138
    %v1203 = vunpack.c.l.b16 %v1139
    %v1204 = vunpack.c.l.b16 %v1140
    %v1205 = vunpack.c.l.b16 %v1141
    %v1206 = vunpack.c.l.b16 %v1142
    %v1207 = vunpack.c.l.b16 %v1143
    %v1208 = vunpack.c.l.b16 %v1144
    %v1209 = vunpack.c.l.b16 %v1145
    %v1210 = vunpack.c.l.b16 %v1146
    %v1211 = vunpack.c.l.b16 %v1147
    %v1212 = vunpack.c.l.b16 %v1148
    %v1213 = vunpack.c.l.b16 %v1149
    %v1214 = vunpack.c.l.b16 %v1150
    %v1215 = vunpack.c.l.b16 %v1151
    %v1216 = vunpack.c.l.b16 %v1152
    %v1217 = vunpack.c.l.b16 %v1153
    %v1218 = vunpack.c.l.b16 %v1154
    %v1219 = vunpack.c.l.b16 %v1155
    %v1220 = vunpack.c.l.b16 %v1156
    %v1221 = vunpack.c.l.b16 %v1157
    %v1222 = vunpack.c.l.b16 %v1158
    %v1223 = vunpack.c.l.b16 %v1159
    %v1224 = vunpack.c.l.b16 %v1160
    %v1225 = vunpack.c.l.b16 %v1161
    %v1226 = vpack.c.b16 %v1195, %v1194
    %v1227 = vpack.c.b16 %v1197, %v1196
    %v1228 = vpack.c.b16 %v1199, %v1198
    %v1229 = vpack.c.b16 %v1201, %v1200
    %v1230 = vpack.c.b16 %v1203, %v1202
    %v1231 = vpack.c.b16 %v1205, %v1204
    %v1232 = vpack.c.b16 %v1207, %v1206
    %v1233 = vpack.c.b16 %v1209, %v1208
    %v1234 = vpack.c.b16 %v1211, %v1210
    %v1235 = vpack.c.b16 %v1213, %v1212
    %v1236 = vpack.c.b16 %v1215, %v1214
    %v1237 = vpack.c.b16 %v1217, %v1216
    %v1238 = vpack.c.b16 %v1219, %v1218
    %v1239 = vpack.c.b16 %v1221, %v1220
    %v1240 = vpack.c.b16 %v1223, %v1222
    %v1241 = vpack.c.b16 %v1225, %v1224
    %1258 = vmatprep.subr.bf16.mxu0 0
    %1259 = vmatpush1.bf16.msra.mxu0 %v1226
    %1260 = vmatprep.subr.bf16.mxu0 0
    %1261 = vmatpush1.bf16.msra.mxu0 %v1227
    %1262 = vmatprep.subr.bf16.mxu0 0
    %1263 = vmatpush1.bf16.msra.mxu0 %v1228
    %1264 = vmatprep.subr.bf16.mxu0 0
    %1265 = vmatpush1.bf16.msra.mxu0 %v1229
    %1266 = vmatprep.subr.bf16.mxu0 0
    %1267 = vmatpush1.bf16.msra.mxu0 %v1230
    %1268 = vmatprep.subr.bf16.mxu0 0
    %1269 = vmatpush1.bf16.msra.mxu0 %v1231
    %1270 = vmatprep.subr.bf16.mxu0 0
    %1271 = vmatpush1.bf16.msra.mxu0 %v1232
    %1272 = vmatprep.subr.bf16.mxu0 0
    %1273 = vmatpush1.bf16.msra.mxu0 %v1233
    %1274 = vmatprep.subr.bf16.mxu0 0
    %1275 = vmatpush1.bf16.msra.mxu0 %v1234
    %1276 = vmatprep.subr.bf16.mxu0 0
    %1277 = vmatpush1.bf16.msra.mxu0 %v1235
    %1278 = vmatprep.subr.bf16.mxu0 0
    %1279 = vmatpush1.bf16.msra.mxu0 %v1236
    %1280 = vmatprep.subr.bf16.mxu0 0
    %1281 = vmatpush1.bf16.msra.mxu0 %v1237
    %1282 = vmatprep.subr.bf16.mxu0 0
    %1283 = vmatpush1.bf16.msra.mxu0 %v1238
    %1284 = vmatprep.subr.bf16.mxu0 0
    %1285 = vmatpush1.bf16.msra.mxu0 %v1239
    %1286 = vmatprep.subr.bf16.mxu0 0
    %1287 = vmatpush1.bf16.msra.mxu0 %v1240
    %1288 = vmatprep.subr.bf16.mxu0 0
    %1289 = vmatpush1.bf16.msra.mxu0 %v1241
    %1290 = vmatprep.mubr.bf16.mxu0 %v1128
    %1291 = vmatmul.mubr.bf16.gmra.mrb[0].mxu0 %v1127
    %v1292 = vpop.f32.mrb[0].mxu0
    %v1293 = vadd.f32 0.0, %v1292
    %v1294 = vpop.f32.mrb[0].mxu0
    %v1295 = vpop.f32.mrb[0].mxu0
    %v1296 = vpop.f32.mrb[0].mxu0
    %1297 = vdwg.mxu0
    %v1298 = vadd.f32 %v1116, %v1293
    %v1299 = vrot.slane %v121, 6
    %v1300 = vrot.slane %v122, 6
    %v1303 = vrot.slane %v211, 5
    %v1304 = vrot.slane %v212, 5
    %v1307 = vsel %vm219, %v1299, %v1303
    %v1308 = vsel %vm219, %v1300, %v1304
    %v1309 = vpack.c.bf16 %v1307, %v1307
    %v1310 = vpack.c.bf16 %v1308, %v1308
    %s1311 = scalar_lea.vmem %s3, 768
    %v1312 = vld [vmem:[%s1311] sm:$0xf]
    %v1313 = vld [vmem:[%s1311 + $0x4] sm:$0xf]
    %v1314 = vld [vmem:[%s1311 + $0x8] sm:$0xf]
    %v1315 = vld [vmem:[%s1311 + $0xc] sm:$0xf]
    %v1316 = vld [vmem:[%s1311 + $0x10] sm:$0xf]
    %v1317 = vld [vmem:[%s1311 + $0x14] sm:$0xf]
    %v1318 = vld [vmem:[%s1311 + $0x18] sm:$0xf]
    %v1319 = vld [vmem:[%s1311 + $0x1c] sm:$0xf]
    %v1320 = vld [vmem:[%s1311 + $0x20] sm:$0xf]
    %v1321 = vld [vmem:[%s1311 + $0x24] sm:$0xf]
    %v1322 = vld [vmem:[%s1311 + $0x28] sm:$0xf]
    %v1323 = vld [vmem:[%s1311 + $0x2c] sm:$0xf]
    %v1324 = vld [vmem:[%s1311 + $0x30] sm:$0xf]
    %v1325 = vld [vmem:[%s1311 + $0x34] sm:$0xf]
    %v1326 = vld [vmem:[%s1311 + $0x38] sm:$0xf]
    %v1327 = vld [vmem:[%s1311 + $0x3c] sm:$0xf]
    %v1328 = vld [vmem:[%s1311 + $0x40] sm:$0xf]
    %v1329 = vld [vmem:[%s1311 + $0x44] sm:$0xf]
    %v1330 = vld [vmem:[%s1311 + $0x48] sm:$0xf]
    %v1331 = vld [vmem:[%s1311 + $0x4c] sm:$0xf]
    %v1332 = vld [vmem:[%s1311 + $0x50] sm:$0xf]
    %v1333 = vld [vmem:[%s1311 + $0x54] sm:$0xf]
    %v1334 = vld [vmem:[%s1311 + $0x58] sm:$0xf]
    %v1335 = vld [vmem:[%s1311 + $0x5c] sm:$0xf]
    %v1336 = vld [vmem:[%s1311 + $0x60] sm:$0xf]
    %v1337 = vld [vmem:[%s1311 + $0x64] sm:$0xf]
    %v1338 = vld [vmem:[%s1311 + $0x68] sm:$0xf]
    %v1339 = vld [vmem:[%s1311 + $0x6c] sm:$0xf]
    %v1340 = vld [vmem:[%s1311 + $0x70] sm:$0xf]
    %v1341 = vld [vmem:[%s1311 + $0x74] sm:$0xf]
    %v1342 = vld [vmem:[%s1311 + $0x78] sm:$0xf]
    %v1343 = vld [vmem:[%s1311 + $0x7c] sm:$0xf]
    %v1376 = vunpack.c.l.b16 %v1312
    %v1377 = vunpack.c.l.b16 %v1313
    %v1378 = vunpack.c.l.b16 %v1314
    %v1379 = vunpack.c.l.b16 %v1315
    %v1380 = vunpack.c.l.b16 %v1316
    %v1381 = vunpack.c.l.b16 %v1317
    %v1382 = vunpack.c.l.b16 %v1318
    %v1383 = vunpack.c.l.b16 %v1319
    %v1384 = vunpack.c.l.b16 %v1320
    %v1385 = vunpack.c.l.b16 %v1321
    %v1386 = vunpack.c.l.b16 %v1322
    %v1387 = vunpack.c.l.b16 %v1323
    %v1388 = vunpack.c.l.b16 %v1324
    %v1389 = vunpack.c.l.b16 %v1325
    %v1390 = vunpack.c.l.b16 %v1326
    %v1391 = vunpack.c.l.b16 %v1327
    %v1392 = vunpack.c.l.b16 %v1328
    %v1393 = vunpack.c.l.b16 %v1329
    %v1394 = vunpack.c.l.b16 %v1330
    %v1395 = vunpack.c.l.b16 %v1331
    %v1396 = vunpack.c.l.b16 %v1332
    %v1397 = vunpack.c.l.b16 %v1333
    %v1398 = vunpack.c.l.b16 %v1334
    %v1399 = vunpack.c.l.b16 %v1335
    %v1400 = vunpack.c.l.b16 %v1336
    %v1401 = vunpack.c.l.b16 %v1337
    %v1402 = vunpack.c.l.b16 %v1338
    %v1403 = vunpack.c.l.b16 %v1339
    %v1404 = vunpack.c.l.b16 %v1340
    %v1405 = vunpack.c.l.b16 %v1341
    %v1406 = vunpack.c.l.b16 %v1342
    %v1407 = vunpack.c.l.b16 %v1343
    %v1408 = vpack.c.b16 %v1377, %v1376
    %v1409 = vpack.c.b16 %v1379, %v1378
    %v1410 = vpack.c.b16 %v1381, %v1380
    %v1411 = vpack.c.b16 %v1383, %v1382
    %v1412 = vpack.c.b16 %v1385, %v1384
    %v1413 = vpack.c.b16 %v1387, %v1386
    %v1414 = vpack.c.b16 %v1389, %v1388
    %v1415 = vpack.c.b16 %v1391, %v1390
    %v1416 = vpack.c.b16 %v1393, %v1392
    %v1417 = vpack.c.b16 %v1395, %v1394
    %v1418 = vpack.c.b16 %v1397, %v1396
    %v1419 = vpack.c.b16 %v1399, %v1398
    %v1420 = vpack.c.b16 %v1401, %v1400
    %v1421 = vpack.c.b16 %v1403, %v1402
    %v1422 = vpack.c.b16 %v1405, %v1404
    %v1423 = vpack.c.b16 %v1407, %v1406
    %1440 = vmatprep.subr.bf16.mxu0 0
    %1441 = vmatpush1.bf16.msra.mxu0 %v1408
    %1442 = vmatprep.subr.bf16.mxu0 0
    %1443 = vmatpush1.bf16.msra.mxu0 %v1409
    %1444 = vmatprep.subr.bf16.mxu0 0
    %1445 = vmatpush1.bf16.msra.mxu0 %v1410
    %1446 = vmatprep.subr.bf16.mxu0 0
    %1447 = vmatpush1.bf16.msra.mxu0 %v1411
    %1448 = vmatprep.subr.bf16.mxu0 0
    %1449 = vmatpush1.bf16.msra.mxu0 %v1412
    %1450 = vmatprep.subr.bf16.mxu0 0
    %1451 = vmatpush1.bf16.msra.mxu0 %v1413
    %1452 = vmatprep.subr.bf16.mxu0 0
    %1453 = vmatpush1.bf16.msra.mxu0 %v1414
    %1454 = vmatprep.subr.bf16.mxu0 0
    %1455 = vmatpush1.bf16.msra.mxu0 %v1415
    %1456 = vmatprep.subr.bf16.mxu0 0
    %1457 = vmatpush1.bf16.msra.mxu0 %v1416
    %1458 = vmatprep.subr.bf16.mxu0 0
    %1459 = vmatpush1.bf16.msra.mxu0 %v1417
    %1460 = vmatprep.subr.bf16.mxu0 0
    %1461 = vmatpush1.bf16.msra.mxu0 %v1418
    %1462 = vmatprep.subr.bf16.mxu0 0
    %1463 = vmatpush1.bf16.msra.mxu0 %v1419
    %1464 = vmatprep.subr.bf16.mxu0 0
    %1465 = vmatpush1.bf16.msra.mxu0 %v1420
    %1466 = vmatprep.subr.bf16.mxu0 0
    %1467 = vmatpush1.bf16.msra.mxu0 %v1421
    %1468 = vmatprep.subr.bf16.mxu0 0
    %1469 = vmatpush1.bf16.msra.mxu0 %v1422
    %1470 = vmatprep.subr.bf16.mxu0 0
    %1471 = vmatpush1.bf16.msra.mxu0 %v1423
    %1472 = vmatprep.mubr.bf16.mxu0 %v1310
    %1473 = vmatmul.mubr.bf16.gmra.mrb[0].mxu0 %v1309
    %v1474 = vpop.f32.mrb[0].mxu0
    %v1475 = vadd.f32 0.0, %v1474
    %v1476 = vpop.f32.mrb[0].mxu0
    %v1477 = vpop.f32.mrb[0].mxu0
    %v1478 = vpop.f32.mrb[0].mxu0
    %1479 = vdwg.mxu0
    %v1480 = vadd.f32 %v1298, %v1475
    %v1481 = vrot.slane %v121, 7
    %v1482 = vrot.slane %v122, 7
    %v1485 = vrot.slane %v211, 6
    %v1486 = vrot.slane %v212, 6
    %v1489 = vsel %vm219, %v1481, %v1485
    %v1490 = vsel %vm219, %v1482, %v1486
    %v1491 = vpack.c.bf16 %v1489, %v1489
    %v1492 = vpack.c.bf16 %v1490, %v1490
    %s1493 = scalar_lea.vmem %s3, 896
    %v1494 = vld [vmem:[%s1493] sm:$0xf]
    %v1495 = vld [vmem:[%s1493 + $0x4] sm:$0xf]
    %v1496 = vld [vmem:[%s1493 + $0x8] sm:$0xf]
    %v1497 = vld [vmem:[%s1493 + $0xc] sm:$0xf]
    %v1498 = vld [vmem:[%s1493 + $0x10] sm:$0xf]
    %v1499 = vld [vmem:[%s1493 + $0x14] sm:$0xf]
    %v1500 = vld [vmem:[%s1493 + $0x18] sm:$0xf]
    %v1501 = vld [vmem:[%s1493 + $0x1c] sm:$0xf]
    %v1502 = vld [vmem:[%s1493 + $0x20] sm:$0xf]
    %v1503 = vld [vmem:[%s1493 + $0x24] sm:$0xf]
    %v1504 = vld [vmem:[%s1493 + $0x28] sm:$0xf]
    %v1505 = vld [vmem:[%s1493 + $0x2c] sm:$0xf]
    %v1506 = vld [vmem:[%s1493 + $0x30] sm:$0xf]
    %v1507 = vld [vmem:[%s1493 + $0x34] sm:$0xf]
    %v1508 = vld [vmem:[%s1493 + $0x38] sm:$0xf]
    %v1509 = vld [vmem:[%s1493 + $0x3c] sm:$0xf]
    %v1510 = vld [vmem:[%s1493 + $0x40] sm:$0xf]
    %v1511 = vld [vmem:[%s1493 + $0x44] sm:$0xf]
    %v1512 = vld [vmem:[%s1493 + $0x48] sm:$0xf]
    %v1513 = vld [vmem:[%s1493 + $0x4c] sm:$0xf]
    %v1514 = vld [vmem:[%s1493 + $0x50] sm:$0xf]
    %v1515 = vld [vmem:[%s1493 + $0x54] sm:$0xf]
    %v1516 = vld [vmem:[%s1493 + $0x58] sm:$0xf]
    %v1517 = vld [vmem:[%s1493 + $0x5c] sm:$0xf]
    %v1518 = vld [vmem:[%s1493 + $0x60] sm:$0xf]
    %v1519 = vld [vmem:[%s1493 + $0x64] sm:$0xf]
    %v1520 = vld [vmem:[%s1493 + $0x68] sm:$0xf]
    %v1521 = vld [vmem:[%s1493 + $0x6c] sm:$0xf]
    %v1522 = vld [vmem:[%s1493 + $0x70] sm:$0xf]
    %v1523 = vld [vmem:[%s1493 + $0x74] sm:$0xf]
    %v1524 = vld [vmem:[%s1493 + $0x78] sm:$0xf]
    %v1525 = vld [vmem:[%s1493 + $0x7c] sm:$0xf]
    %v1558 = vunpack.c.l.b16 %v1494
    %v1559 = vunpack.c.l.b16 %v1495
    %v1560 = vunpack.c.l.b16 %v1496
    %v1561 = vunpack.c.l.b16 %v1497
    %v1562 = vunpack.c.l.b16 %v1498
    %v1563 = vunpack.c.l.b16 %v1499
    %v1564 = vunpack.c.l.b16 %v1500
    %v1565 = vunpack.c.l.b16 %v1501
    %v1566 = vunpack.c.l.b16 %v1502
    %v1567 = vunpack.c.l.b16 %v1503
    %v1568 = vunpack.c.l.b16 %v1504
    %v1569 = vunpack.c.l.b16 %v1505
    %v1570 = vunpack.c.l.b16 %v1506
    %v1571 = vunpack.c.l.b16 %v1507
    %v1572 = vunpack.c.l.b16 %v1508
    %v1573 = vunpack.c.l.b16 %v1509
    %v1574 = vunpack.c.l.b16 %v1510
    %v1575 = vunpack.c.l.b16 %v1511
    %v1576 = vunpack.c.l.b16 %v1512
    %v1577 = vunpack.c.l.b16 %v1513
    %v1578 = vunpack.c.l.b16 %v1514
    %v1579 = vunpack.c.l.b16 %v1515
    %v1580 = vunpack.c.l.b16 %v1516
    %v1581 = vunpack.c.l.b16 %v1517
    %v1582 = vunpack.c.l.b16 %v1518
    %v1583 = vunpack.c.l.b16 %v1519
    %v1584 = vunpack.c.l.b16 %v1520
    %v1585 = vunpack.c.l.b16 %v1521
    %v1586 = vunpack.c.l.b16 %v1522
    %v1587 = vunpack.c.l.b16 %v1523
    %v1588 = vunpack.c.l.b16 %v1524
    %v1589 = vunpack.c.l.b16 %v1525
    %v1590 = vpack.c.b16 %v1559, %v1558
    %v1591 = vpack.c.b16 %v1561, %v1560
    %v1592 = vpack.c.b16 %v1563, %v1562
    %v1593 = vpack.c.b16 %v1565, %v1564
    %v1594 = vpack.c.b16 %v1567, %v1566
    %v1595 = vpack.c.b16 %v1569, %v1568
    %v1596 = vpack.c.b16 %v1571, %v1570
    %v1597 = vpack.c.b16 %v1573, %v1572
    %v1598 = vpack.c.b16 %v1575, %v1574
    %v1599 = vpack.c.b16 %v1577, %v1576
    %v1600 = vpack.c.b16 %v1579, %v1578
    %v1601 = vpack.c.b16 %v1581, %v1580
    %v1602 = vpack.c.b16 %v1583, %v1582
    %v1603 = vpack.c.b16 %v1585, %v1584
    %v1604 = vpack.c.b16 %v1587, %v1586
    %v1605 = vpack.c.b16 %v1589, %v1588
    %1622 = vmatprep.subr.bf16.mxu0 0
    %1623 = vmatpush1.bf16.msra.mxu0 %v1590
    %1624 = vmatprep.subr.bf16.mxu0 0
    %1625 = vmatpush1.bf16.msra.mxu0 %v1591
    %1626 = vmatprep.subr.bf16.mxu0 0
    %1627 = vmatpush1.bf16.msra.mxu0 %v1592
    %1628 = vmatprep.subr.bf16.mxu0 0
    %1629 = vmatpush1.bf16.msra.mxu0 %v1593
    %1630 = vmatprep.subr.bf16.mxu0 0
    %1631 = vmatpush1.bf16.msra.mxu0 %v1594
    %1632 = vmatprep.subr.bf16.mxu0 0
    %1633 = vmatpush1.bf16.msra.mxu0 %v1595
    %1634 = vmatprep.subr.bf16.mxu0 0
    %1635 = vmatpush1.bf16.msra.mxu0 %v1596
    %1636 = vmatprep.subr.bf16.mxu0 0
    %1637 = vmatpush1.bf16.msra.mxu0 %v1597
    %1638 = vmatprep.subr.bf16.mxu0 0
    %1639 = vmatpush1.bf16.msra.mxu0 %v1598
    %1640 = vmatprep.subr.bf16.mxu0 0
    %1641 = vmatpush1.bf16.msra.mxu0 %v1599
    %1642 = vmatprep.subr.bf16.mxu0 0
    %1643 = vmatpush1.bf16.msra.mxu0 %v1600
    %1644 = vmatprep.subr.bf16.mxu0 0
    %1645 = vmatpush1.bf16.msra.mxu0 %v1601
    %1646 = vmatprep.subr.bf16.mxu0 0
    %1647 = vmatpush1.bf16.msra.mxu0 %v1602
    %1648 = vmatprep.subr.bf16.mxu0 0
    %1649 = vmatpush1.bf16.msra.mxu0 %v1603
    %1650 = vmatprep.subr.bf16.mxu0 0
    %1651 = vmatpush1.bf16.msra.mxu0 %v1604
    %1652 = vmatprep.subr.bf16.mxu0 0
    %1653 = vmatpush1.bf16.msra.mxu0 %v1605
    %1654 = vmatprep.mubr.bf16.mxu0 %v1492
    %1655 = vmatmul.mubr.bf16.gmra.mrb[0].mxu0 %v1491
    %v1656 = vpop.f32.mrb[0].mxu0
    %v1657 = vadd.f32 0.0, %v1656
    %v1658 = vpop.f32.mrb[0].mxu0
    %v1659 = vpop.f32.mrb[0].mxu0
    %v1660 = vpop.f32.mrb[0].mxu0
    %1661 = vdwg.mxu0
    %v1662 = vadd.f32 %v1480, %v1657
    %v1663 = vld [vmem:[%s4] sm:$0x1]
    %v1665 = vlaneseq
    %v1666 = vshrl.u32 %v1665, 7
    %v1667 = vsub.s32 0, %v1666
    %v1668 = vrot.slane %v1663, %v1667
    %v1670 = vadd.f32 %v1662, %v1668
    %1671 = vst [vmem:[#allocation2] sm:$0x3] %v1670
    // Predicated region
    $region22: #{face_recognition_forward.1} parent=1 // pred_check
      _
    $region23: #{face_recognition_forward.1} parent=1 // pred_check_branch
      %1673 = sbr.rel (0) target = $region25
    $region24: #{face_recognition_forward.1} parent=1 // pred_region
      %s1675 = ssub.s32 32, 32
      %1676 = vsyncadd [#allocation3], %s1675
      %s1678 = sshll.u32 [#allocation2], 4
      %s1679 = int_to_ptr.vmem [resolvable:$true] %s1678
      %1681 = dma.vmem_to_hbm [thread:$0]  %s1679, 32, %s5, [#allocation3]
    $region25: #{face_recognition_forward.1} parent=1 // pred_fallthru
      _
    // Predicated region
    $region26: #{face_recognition_forward.1} parent=1 // pred_check
      _
    $region27: #{face_recognition_forward.1} parent=1 // pred_check_branch
      %1683 = sbr.rel (0) target = $region29
    $region28: #{face_recognition_forward.1} parent=1 // pred_region
      %1684 = dma.done [#allocation3], 32
    $region29: #{face_recognition_forward.1} parent=1 // pred_fallthru
      _
    %1685 = vsyncpa [#allocation3], 1

</llo_original>
